<compile_context>
chip_gen: v5e
topology: v5e:2x2
jax: 0.10.0
libtpu: 0.0.40
codegen_flags: <defaults>
</compile_context>

<pallas_src>
import jax
import jax.numpy as jnp
from jax.experimental import pallas as pl
from jax.experimental.pallas import tpu as pltpu

INPUT_SIZE = 16                       # spatial side -> size = 256 features
SIZE = INPUT_SIZE * INPUT_SIZE        # 256
H1 = 1024
H2 = 256
OUT = 10
OUT_PAD = 128                         # lane-dense padded output width
TM_MAX = 256                          # max batch rows per grid step


def mlp_kernel(x_ref, w1_ref, b1_ref, w2_ref, b2_ref, w3_ref, b3_ref, o_ref):
    # fc1 + ReLU: bf16 x bf16 -> f32 accumulate, epilogue in f32.
    h1 = jnp.dot(x_ref[...], w1_ref[...], preferred_element_type=jnp.float32)
    h1 = jnp.maximum(h1 + b1_ref[...], 0.0)
    # fc2 + ReLU
    h2 = jnp.dot(h1.astype(jnp.bfloat16), w2_ref[...],
                 preferred_element_type=jnp.float32)
    h2 = jnp.maximum(h2 + b2_ref[...], 0.0)
    # fc3 (no activation); w3/b3 are zero-padded to OUT_PAD lanes.
    o = jnp.dot(h2.astype(jnp.bfloat16), w3_ref[...],
                preferred_element_type=jnp.float32)
    o_ref[...] = o + b3_ref[...]


def prepare_params(raw_params):
    """One-time conversion of nn.Linear-style f32 params to kernel layout.

    Done once at init (NOT per forward): fc3 pad to 128 lanes, bias reshape to
    (1, N), weights cast to bf16 (biases stay f32 for the f32 epilogue).
    """
    w1, b1, w2, b2, w3, b3 = raw_params
    w3_pad = jnp.zeros((H2, OUT_PAD), jnp.float32).at[:, :OUT].set(w3)
    b3_pad = jnp.zeros((1, OUT_PAD), jnp.float32).at[:, :OUT].set(b3)
    return (
        w1.astype(jnp.bfloat16), b1.reshape(1, H1).astype(jnp.float32),
        w2.astype(jnp.bfloat16), b2.reshape(1, H2).astype(jnp.float32),
        w3_pad.astype(jnp.bfloat16), b3_pad,
    )


def mymodel_forward(x, kernel_params):
    """x: (B, 1, H, W) float32 NCHW. kernel_params from prepare_params().
    Returns (B, 10) float32."""
    w1, b1, w2, b2, w3p, b3p = kernel_params
    B = x.shape[0]
    x_flat = x.reshape(B, SIZE).astype(jnp.bfloat16)

    # Pick the batch tile: one step for small batches, TM_MAX-row tiles for
    # large ones (weights stay resident across steps; x/out are pipelined).
    if B <= TM_MAX:
        tm = max(8, ((B + 7) // 8) * 8)     # sublane-aligned single tile
        b_pad = tm
    else:
        tm = TM_MAX
        b_pad = ((B + tm - 1) // tm) * tm
    if b_pad != B:
        x_flat = jnp.pad(x_flat, ((0, b_pad - B), (0, 0)))
    n_steps = b_pad // tm

    const = lambda shape: pl.BlockSpec(shape, lambda i: tuple(0 for _ in shape))

    flops = 2 * b_pad * (SIZE * H1 + H1 * H2 + H2 * OUT_PAD)
    bytes_accessed = (
        b_pad * SIZE * 2                       # x (bf16)
        + (SIZE * H1 + H1 * H2 + H2 * OUT_PAD) * 2   # weights (bf16)
        + (H1 + H2 + OUT_PAD) * 4              # biases (f32)
        + b_pad * OUT_PAD * 4                  # out (f32)
    )

    out_pad = pl.pallas_call(
        mlp_kernel,
        out_shape=jax.ShapeDtypeStruct((b_pad, OUT_PAD), jnp.float32),
        grid_spec=pltpu.PrefetchScalarGridSpec(
            num_scalar_prefetch=0,
            grid=(n_steps,),
            in_specs=[
                pl.BlockSpec((tm, SIZE), lambda i: (i, 0)),   # x: tiled on batch
                const((SIZE, H1)), const((1, H1)),            # weights: resident
                const((H1, H2)), const((1, H2)),
                const((H2, OUT_PAD)), const((1, OUT_PAD)),
            ],
            out_specs=pl.BlockSpec((tm, OUT_PAD), lambda i: (i, 0)),
        ),
        compiler_params=pltpu.CompilerParams(
            dimension_semantics=("parallel",),                # v7x: split batch across TCs
        ),
        cost_estimate=pl.CostEstimate(
            flops=flops, transcendentals=0, bytes_accessed=bytes_accessed),
    )(x_flat, w1, b1, w2, b2, w3p, b3p)

    return out_pad[:B, :OUT]


def init_params(key):
    """Deterministic init matching nn.Linear shapes (weights stored transposed),
    kept in f32 (PyTorch-equivalent 'master' params)."""
    ks = jax.random.split(key, 6)

    def linear(kw, kb, fan_in, fan_out):
        bound = 1.0 / jnp.sqrt(fan_in)
        w = jax.random.uniform(kw, (fan_in, fan_out), jnp.float32, -bound, bound)
        b = jax.random.uniform(kb, (fan_out,), jnp.float32, -bound, bound)
        return w, b

    w1, b1 = linear(ks[0], ks[1], SIZE, H1)
    w2, b2 = linear(ks[2], ks[3], H1, H2)
    w3, b3 = linear(ks[4], ks[5], H2, OUT)
    return (w1, b1, w2, b2, w3, b3)


if __name__ == "__main__":
    key = jax.random.PRNGKey(0)
    k_x, k_p = jax.random.split(key)

    B = 8
    x = jax.random.normal(k_x, (B, 1, INPUT_SIZE, INPUT_SIZE), jnp.float32)
    raw_params = init_params(k_p)
    kernel_params = prepare_params(raw_params)   # one-time weight prep (hoisted)

    out = mymodel_forward(x, kernel_params)
    out = jax.block_until_ready(out)
    assert out.shape == (B, OUT), out.shape

    # Cross-check against a pure-JAX f32 reference of the same forward pass.
    # Tolerance loosened vs. the f32 kernel because weights/activations stream
    # in bf16 (accumulation is still f32).
    w1, b1, w2, b2, w3, b3 = raw_params
    xf = x.reshape(B, SIZE)
    ref = jnp.maximum(xf @ w1 + b1, 0.0)
    ref = jnp.maximum(ref @ w2 + b2, 0.0)
    ref = ref @ w3 + b3
    assert jnp.allclose(out, ref, atol=5e-2, rtol=5e-2), (
        float(jnp.max(jnp.abs(out - ref))))

    print("KERNEL_OK")
</pallas_src>

<mosaic_0001>
module attributes {stable_mosaic.version = 11 : i64} {
  func.func @mlp_kernel(%arg0: i32, %arg1: memref<8x256xbf16, #tpu.memory_space<vmem>>, %arg2: memref<256x1024xbf16, #tpu.memory_space<vmem>>, %arg3: memref<1x1024xf32, #tpu.memory_space<vmem>>, %arg4: memref<1024x256xbf16, #tpu.memory_space<vmem>>, %arg5: memref<1x256xf32, #tpu.memory_space<vmem>>, %arg6: memref<256x128xbf16, #tpu.memory_space<vmem>>, %arg7: memref<1x128xf32, #tpu.memory_space<vmem>>, %arg8: memref<8x128xf32, #tpu.memory_space<vmem>>) attributes {dimension_semantics = [#tpu.dimension_semantics<parallel>], iteration_bounds = array<i64: 1>, scalar_prefetch = 0 : i64, scratch_operands = 0 : i64, tpu.core_type = #tpu.core_type<tc>, window_params = [{transform_indices = @transform_0, window_bounds = array<i64: 8, 256>}, {pipeline_mode = #tpu.pipeline_mode<synchronous>, transform_indices = @transform_1, window_bounds = array<i64: 256, 1024>}, {pipeline_mode = #tpu.pipeline_mode<synchronous>, transform_indices = @transform_2, window_bounds = array<i64: 1, 1024>}, {pipeline_mode = #tpu.pipeline_mode<synchronous>, transform_indices = @transform_3, window_bounds = array<i64: 1024, 256>}, {pipeline_mode = #tpu.pipeline_mode<synchronous>, transform_indices = @transform_4, window_bounds = array<i64: 1, 256>}, {pipeline_mode = #tpu.pipeline_mode<synchronous>, transform_indices = @transform_5, window_bounds = array<i64: 256, 128>}, {pipeline_mode = #tpu.pipeline_mode<synchronous>, transform_indices = @transform_6, window_bounds = array<i64: 1, 128>}, {transform_indices = @transform_7, window_bounds = array<i64: 8, 128>}]} {
    %c0 = arith.constant 0 : index
    %c0_0 = arith.constant 0 : index
    %0 = vector.load %arg1[%c0, %c0_0] : memref<8x256xbf16, #tpu.memory_space<vmem>>, vector<8x256xbf16>
    %c0_1 = arith.constant 0 : index
    %c0_2 = arith.constant 0 : index
    %1 = vector.load %arg2[%c0_1, %c0_2] : memref<256x1024xbf16, #tpu.memory_space<vmem>>, vector<256x1024xbf16>
    %cst = arith.constant dense<0.000000e+00> : vector<8x1024xf32>
    %2 = tpu.matmul %0, %1, %cst {dimension_numbers = #tpu.dot_dimension_numbers<[1], [0], [0], [1], [0, 0, 1, 1], [], []>} : vector<8x256xbf16>, vector<256x1024xbf16>, vector<8x1024xf32> -> vector<8x1024xf32>
    %c0_3 = arith.constant 0 : index
    %c0_4 = arith.constant 0 : index
    %3 = vector.load %arg3[%c0_3, %c0_4] : memref<1x1024xf32, #tpu.memory_space<vmem>>, vector<1x1024xf32>
    %4 = vector.broadcast %3 : vector<1x1024xf32> to vector<8x1024xf32>
    %5 = arith.addf %2, %4 : vector<8x1024xf32>
    %cst_5 = arith.constant 0.000000e+00 : f32
    %6 = vector.broadcast %cst_5 : f32 to vector<8x1024xf32>
    %7 = arith.maximumf %5, %6 : vector<8x1024xf32>
    %8 = arith.truncf %7 : vector<8x1024xf32> to vector<8x1024xbf16>
    %c0_6 = arith.constant 0 : index
    %c0_7 = arith.constant 0 : index
    %9 = vector.load %arg4[%c0_6, %c0_7] : memref<1024x256xbf16, #tpu.memory_space<vmem>>, vector<1024x256xbf16>
    %cst_8 = arith.constant dense<0.000000e+00> : vector<8x256xf32>
    %10 = tpu.matmul %8, %9, %cst_8 {dimension_numbers = #tpu.dot_dimension_numbers<[1], [0], [0], [1], [0, 0, 1, 1], [], []>} : vector<8x1024xbf16>, vector<1024x256xbf16>, vector<8x256xf32> -> vector<8x256xf32>
    %c0_9 = arith.constant 0 : index
    %c0_10 = arith.constant 0 : index
    %11 = vector.load %arg5[%c0_9, %c0_10] : memref<1x256xf32, #tpu.memory_space<vmem>>, vector<1x256xf32>
    %12 = vector.broadcast %11 : vector<1x256xf32> to vector<8x256xf32>
    %13 = arith.addf %10, %12 : vector<8x256xf32>
    %cst_11 = arith.constant 0.000000e+00 : f32
    %14 = vector.broadcast %cst_11 : f32 to vector<8x256xf32>
    %15 = arith.maximumf %13, %14 : vector<8x256xf32>
    %16 = arith.truncf %15 : vector<8x256xf32> to vector<8x256xbf16>
    %c0_12 = arith.constant 0 : index
    %c0_13 = arith.constant 0 : index
    %17 = vector.load %arg6[%c0_12, %c0_13] : memref<256x128xbf16, #tpu.memory_space<vmem>>, vector<256x128xbf16>
    %cst_14 = arith.constant dense<0.000000e+00> : vector<8x128xf32>
    %18 = tpu.matmul %16, %17, %cst_14 {dimension_numbers = #tpu.dot_dimension_numbers<[1], [0], [0], [1], [0, 0, 1, 1], [], []>} : vector<8x256xbf16>, vector<256x128xbf16>, vector<8x128xf32> -> vector<8x128xf32>
    %c0_15 = arith.constant 0 : index
    %c0_16 = arith.constant 0 : index
    %19 = vector.load %arg7[%c0_15, %c0_16] : memref<1x128xf32, #tpu.memory_space<vmem>>, vector<1x128xf32>
    %20 = vector.broadcast %19 : vector<1x128xf32> to vector<8x128xf32>
    %21 = arith.addf %18, %20 : vector<8x128xf32>
    %c0_17 = arith.constant 0 : index
    %c0_18 = arith.constant 0 : index
    %22 = vector.load %arg8[%c0_17, %c0_18] : memref<8x128xf32, #tpu.memory_space<vmem>>, vector<8x128xf32>
    tpu.vector_store %arg8[%c0_17, %c0_18], %21 {strides = array<i32>} : memref<8x128xf32, #tpu.memory_space<vmem>>, vector<8x128xf32>,
    return
  }
  func.func @transform_0(%arg0: i32) -> (i32, i32) {
    %c0_i32 = arith.constant 0 : i32
    %c0_i32_0 = arith.constant 0 : i32
    return %arg0, %c0_i32 : i32, i32
  }
  func.func @transform_1(%arg0: i32) -> (i32, i32) {
    %c0_i32 = arith.constant 0 : i32
    %c0_i32_0 = arith.constant 0 : i32
    %c0_i32_1 = arith.constant 0 : i32
    return %c0_i32, %c0_i32_0 : i32, i32
  }
  func.func @transform_2(%arg0: i32) -> (i32, i32) {
    %c0_i32 = arith.constant 0 : i32
    %c0_i32_0 = arith.constant 0 : i32
    %c0_i32_1 = arith.constant 0 : i32
    return %c0_i32, %c0_i32_0 : i32, i32
  }
  func.func @transform_3(%arg0: i32) -> (i32, i32) {
    %c0_i32 = arith.constant 0 : i32
    %c0_i32_0 = arith.constant 0 : i32
    %c0_i32_1 = arith.constant 0 : i32
    return %c0_i32, %c0_i32_0 : i32, i32
  }
  func.func @transform_4(%arg0: i32) -> (i32, i32) {
    %c0_i32 = arith.constant 0 : i32
    %c0_i32_0 = arith.constant 0 : i32
    %c0_i32_1 = arith.constant 0 : i32
    return %c0_i32, %c0_i32_0 : i32, i32
  }
  func.func @transform_5(%arg0: i32) -> (i32, i32) {
    %c0_i32 = arith.constant 0 : i32
    %c0_i32_0 = arith.constant 0 : i32
    %c0_i32_1 = arith.constant 0 : i32
    return %c0_i32, %c0_i32_0 : i32, i32
  }
  func.func @transform_6(%arg0: i32) -> (i32, i32) {
    %c0_i32 = arith.constant 0 : i32
    %c0_i32_0 = arith.constant 0 : i32
    %c0_i32_1 = arith.constant 0 : i32
    return %c0_i32, %c0_i32_0 : i32, i32
  }
  func.func @transform_7(%arg0: i32) -> (i32, i32) {
    %c0_i32 = arith.constant 0 : i32
    %c0_i32_0 = arith.constant 0 : i32
    return %arg0, %c0_i32 : i32, i32
  }
}

</mosaic_0001>

<llo_original>
// kernel: tpu_custom_call.1
$region0: #{tpu_custom_call.1}
  #allocation0 [shape = 'u32[]', space=smem, size = 0x4, offset = 0x4, fixed_abs, tag = 'smem constant byte address 0x4 - core index']
  #allocation1 [shape = 'u32[72,128]{1,0:T(1,128)}', space=vmem, size = 0x9000, scoped, tag = 'internal scratch']
  %s0 = inlined_call_operand.hbm [shape: bf16[8,256], index: 0, kind: input, shape index: {}]
  %s1 = inlined_call_operand.hbm [shape: bf16[256,1024], index: 1, kind: input, shape index: {}]
  %s2 = inlined_call_operand.hbm [shape: f32[1,1024], index: 2, kind: input, shape index: {}]
  %s3 = inlined_call_operand.hbm [shape: bf16[1024,256], index: 3, kind: input, shape index: {}]
  %s4 = inlined_call_operand.vmem [shape: f32[1,256], index: 4, kind: input, shape index: {}]
  %s5 = inlined_call_operand.hbm [shape: bf16[256,128], index: 5, kind: input, shape index: {}]
  %s6 = inlined_call_operand.vmem [shape: f32[1,128], index: 6, kind: input, shape index: {}]
  %s7 = inlined_call_operand.hbm [shape: f32[8,128], index: 7, kind: output, shape index: {}]
  %s8 = sld [smem:[#allocation0]]
  $region58: #{tpu_custom_call.1} parent=0
    _
  %s10 = ssub.s32 1, %s8
  %s11 = scalar_select 0, %s10, %s8
  $region1: #{tpu_custom_call.1} parent=0
    #allocation2 [shape = 'u8[4096]{0}', space=vmem, size = 0x1000, scoped, tag = 'input window, operand 0, single buffered']
    #allocation3 [shape = 's32[1]{0}', space=sflag, size = 0x4, scoped, tag = 'scoped memory for tpu_custom_call.1']
    #allocation4 [shape = 's32[1]{0}', space=sflag, size = 0x4, scoped, tag = 'scoped memory for tpu_custom_call.1']
    #allocation5 [shape = 'u8[524288]{0}', space=vmem, size = 0x80000, scoped, tag = 'input window, operand 1, single buffered']
    #allocation6 [shape = 's32[1]{0}', space=sflag, size = 0x4, scoped, tag = 'scoped memory for tpu_custom_call.1']
    #allocation7 [shape = 'u8[4096]{0}', space=vmem, size = 0x1000, scoped, tag = 'input window, operand 2, single buffered']
    #allocation8 [shape = 'u8[524288]{0}', space=vmem, size = 0x80000, scoped, tag = 'input window, operand 3, single buffered']
    #allocation9 [shape = 's32[1]{0}', space=sflag, size = 0x4, scoped, tag = 'scoped memory for tpu_custom_call.1']
    #allocation10 [shape = 'u8[65536]{0}', space=vmem, size = 0x10000, scoped, tag = 'input window, operand 5, single buffered']
    #allocation11 [shape = 'u8[4096]{0}', space=vmem, size = 0x1000, scoped, tag = 'output window, operand 0, single buffered']
    %12 = vsyncpa [#allocation3], 0
    %13 = vsyncpa [#allocation6], 0
    %14 = vsyncpa [#allocation9], 0
    %15 = vsyncpa [#allocation4], 0
    // Predicated region
    $region2: #{tpu_custom_call.1} parent=1 // pred_check
      _
    $region3: #{tpu_custom_call.1} parent=1 // pred_check_branch
      %17 = sbr.rel (0) target = $region5
    $region4: #{tpu_custom_call.1} parent=1 // pred_region
      %19 = vsyncadd [#allocation3], 0
      %s21 = sshll.u32 %s0, 4
      %s22 = int_to_ptr.hbm [resolvable:$true] %s21
      %s23 = sshll.u32 [#allocation2], 4
      %s24 = int_to_ptr.vmem [resolvable:$true] %s23
      %26 = dma.hbm_to_vmem [thread:$0]  %s22, 128, %s24, [#allocation3]
    $region5: #{tpu_custom_call.1} parent=1 // pred_fallthru
      _
    // Predicated region
    $region6: #{tpu_custom_call.1} parent=1 // pred_check
      _
    $region7: #{tpu_custom_call.1} parent=1 // pred_check_branch
      %28 = sbr.rel (0) target = $region9
    $region8: #{tpu_custom_call.1} parent=1 // pred_region
      %30 = vsyncadd [#allocation6], 0
      %s31 = sshll.u32 %s1, 4
      %s32 = int_to_ptr.hbm [resolvable:$true] %s31
      %s33 = sshll.u32 [#allocation5], 4
      %s34 = int_to_ptr.vmem [resolvable:$true] %s33
      %39 = dma.hbm_to_vmem [thread:$0]  %s32, 16384, %s34, [#allocation6], 512, 512, 32
    $region9: #{tpu_custom_call.1} parent=1 // pred_fallthru
      _
    // Predicated region
    $region10: #{tpu_custom_call.1} parent=1 // pred_check
      _
    $region11: #{tpu_custom_call.1} parent=1 // pred_check_branch
      %41 = sbr.rel (0) target = $region13
    $region12: #{tpu_custom_call.1} parent=1 // pred_region
      %43 = vsyncadd [#allocation6], 0
      %s45 = sshll.u32 %s2, 4
      %s46 = int_to_ptr.hbm [resolvable:$true] %s45
      %s47 = sshll.u32 [#allocation7], 4
      %s48 = int_to_ptr.vmem [resolvable:$true] %s47
      %50 = dma.hbm_to_vmem [thread:$0]  %s46, 128, %s48, [#allocation6]
    $region13: #{tpu_custom_call.1} parent=1 // pred_fallthru
      _
    // Predicated region
    $region14: #{tpu_custom_call.1} parent=1 // pred_check
      _
    $region15: #{tpu_custom_call.1} parent=1 // pred_check_branch
      %52 = sbr.rel (0) target = $region17
    $region16: #{tpu_custom_call.1} parent=1 // pred_region
      %54 = vsyncadd [#allocation9], 0
      %s55 = sshll.u32 %s3, 4
      %s56 = int_to_ptr.hbm [resolvable:$true] %s55
      %s57 = sshll.u32 [#allocation8], 4
      %s58 = int_to_ptr.vmem [resolvable:$true] %s57
      %63 = dma.hbm_to_vmem [thread:$0]  %s56, 16384, %s58, [#allocation9], 128, 128, 8
    $region17: #{tpu_custom_call.1} parent=1 // pred_fallthru
      _
    // Predicated region
    $region18: #{tpu_custom_call.1} parent=1 // pred_check
      _
    $region19: #{tpu_custom_call.1} parent=1 // pred_check_branch
      %65 = sbr.rel (0) target = $region21
    $region20: #{tpu_custom_call.1} parent=1 // pred_region
      _
    $region21: #{tpu_custom_call.1} parent=1 // pred_fallthru
      _
    // Predicated region
    $region22: #{tpu_custom_call.1} parent=1 // pred_check
      _
    $region23: #{tpu_custom_call.1} parent=1 // pred_check_branch
      %67 = sbr.rel (0) target = $region25
    $region24: #{tpu_custom_call.1} parent=1 // pred_region
      %69 = vsyncadd [#allocation9], 0
      %s70 = sshll.u32 %s5, 4
      %s71 = int_to_ptr.hbm [resolvable:$true] %s70
      %s72 = sshll.u32 [#allocation10], 4
      %s73 = int_to_ptr.vmem [resolvable:$true] %s72
      %78 = dma.hbm_to_vmem [thread:$0]  %s71, 2048, %s73, [#allocation9], 64, 64, 4
    $region25: #{tpu_custom_call.1} parent=1 // pred_fallthru
      _
    // Predicated region
    $region26: #{tpu_custom_call.1} parent=1 // pred_check
      _
    $region27: #{tpu_custom_call.1} parent=1 // pred_check_branch
      %80 = sbr.rel (0) target = $region29
    $region28: #{tpu_custom_call.1} parent=1 // pred_region
      _
    $region29: #{tpu_custom_call.1} parent=1 // pred_fallthru
      _
    // Predicated region
    $region30: #{tpu_custom_call.1} parent=1 // pred_check
      _
    $region31: #{tpu_custom_call.1} parent=1 // pred_check_branch
      %82 = sbr.rel (0) target = $region33
    $region32: #{tpu_custom_call.1} parent=1 // pred_region
      %84 = dma.done [#allocation3], 128
    $region33: #{tpu_custom_call.1} parent=1 // pred_fallthru
      _
    // Predicated region
    $region34: #{tpu_custom_call.1} parent=1 // pred_check
      _
    $region35: #{tpu_custom_call.1} parent=1 // pred_check_branch
      %86 = sbr.rel (0) target = $region37
    $region36: #{tpu_custom_call.1} parent=1 // pred_region
      %88 = dma.done [#allocation6], 16384
    $region37: #{tpu_custom_call.1} parent=1 // pred_fallthru
      _
    // Predicated region
    $region38: #{tpu_custom_call.1} parent=1 // pred_check
      _
    $region39: #{tpu_custom_call.1} parent=1 // pred_check_branch
      %90 = sbr.rel (0) target = $region41
    $region40: #{tpu_custom_call.1} parent=1 // pred_region
      %92 = dma.done [#allocation6], 128
    $region41: #{tpu_custom_call.1} parent=1 // pred_fallthru
      _
    // Predicated region
    $region42: #{tpu_custom_call.1} parent=1 // pred_check
      _
    $region43: #{tpu_custom_call.1} parent=1 // pred_check_branch
      %94 = sbr.rel (0) target = $region45
    $region44: #{tpu_custom_call.1} parent=1 // pred_region
      %96 = dma.done [#allocation9], 16384
    $region45: #{tpu_custom_call.1} parent=1 // pred_fallthru
      _
    // Predicated region
    $region46: #{tpu_custom_call.1} parent=1 // pred_check
      _
    $region47: #{tpu_custom_call.1} parent=1 // pred_check_branch
      %98 = sbr.rel (0) target = $region49
    $region48: #{tpu_custom_call.1} parent=1 // pred_region
      %100 = dma.done [#allocation9], 2048
    $region49: #{tpu_custom_call.1} parent=1 // pred_fallthru
      _
    %v101 = vld [vmem:[#allocation2] sm:$0xff]
    %v102 = vld [vmem:[#allocation5] sm:$0xff]
    %v103 = vld [vmem:[#allocation5 + $0x8] sm:$0xff]
    %v104 = vld [vmem:[#allocation5 + $0x10] sm:$0xff]
    %v105 = vld [vmem:[#allocation5 + $0x18] sm:$0xff]
    %v106 = vld [vmem:[#allocation5 + $0x20] sm:$0xff]
    %v107 = vld [vmem:[#allocation5 + $0x28] sm:$0xff]
    %v108 = vld [vmem:[#allocation5 + $0x30] sm:$0xff]
    %v109 = vld [vmem:[#allocation5 + $0x38] sm:$0xff]
    %v110 = vld [vmem:[#allocation5 + $0x40] sm:$0xff]
    %v111 = vld [vmem:[#allocation5 + $0x48] sm:$0xff]
    %v112 = vld [vmem:[#allocation5 + $0x50] sm:$0xff]
    %v113 = vld [vmem:[#allocation5 + $0x58] sm:$0xff]
    %v114 = vld [vmem:[#allocation5 + $0x60] sm:$0xff]
    %v115 = vld [vmem:[#allocation5 + $0x68] sm:$0xff]
    %v116 = vld [vmem:[#allocation5 + $0x70] sm:$0xff]
    %v117 = vld [vmem:[#allocation5 + $0x78] sm:$0xff]
    %v118 = vld [vmem:[#allocation5 + $0x80] sm:$0xff]
    %v119 = vld [vmem:[#allocation5 + $0x88] sm:$0xff]
    %v120 = vld [vmem:[#allocation5 + $0x90] sm:$0xff]
    %v121 = vld [vmem:[#allocation5 + $0x98] sm:$0xff]
    %v122 = vld [vmem:[#allocation5 + $0xa0] sm:$0xff]
    %v123 = vld [vmem:[#allocation5 + $0xa8] sm:$0xff]
    %v124 = vld [vmem:[#allocation5 + $0xb0] sm:$0xff]
    %v125 = vld [vmem:[#allocation5 + $0xb8] sm:$0xff]
    %v126 = vld [vmem:[#allocation5 + $0xc0] sm:$0xff]
    %v127 = vld [vmem:[#allocation5 + $0xc8] sm:$0xff]
    %v128 = vld [vmem:[#allocation5 + $0xd0] sm:$0xff]
    %v129 = vld [vmem:[#allocation5 + $0xd8] sm:$0xff]
    %v130 = vld [vmem:[#allocation5 + $0xe0] sm:$0xff]
    %v131 = vld [vmem:[#allocation5 + $0xe8] sm:$0xff]
    %v132 = vld [vmem:[#allocation5 + $0xf0] sm:$0xff]
    %v133 = vld [vmem:[#allocation5 + $0xf8] sm:$0xff]
    %v134 = vld [vmem:[#allocation5 + $0x100] sm:$0xff]
    %v135 = vld [vmem:[#allocation5 + $0x108] sm:$0xff]
    %v136 = vld [vmem:[#allocation5 + $0x110] sm:$0xff]
    %v137 = vld [vmem:[#allocation5 + $0x118] sm:$0xff]
    %v138 = vld [vmem:[#allocation5 + $0x120] sm:$0xff]
    %v139 = vld [vmem:[#allocation5 + $0x128] sm:$0xff]
    %v140 = vld [vmem:[#allocation5 + $0x130] sm:$0xff]
    %v141 = vld [vmem:[#allocation5 + $0x138] sm:$0xff]
    %v142 = vld [vmem:[#allocation5 + $0x140] sm:$0xff]
    %v143 = vld [vmem:[#allocation5 + $0x148] sm:$0xff]
    %v144 = vld [vmem:[#allocation5 + $0x150] sm:$0xff]
    %v145 = vld [vmem:[#allocation5 + $0x158] sm:$0xff]
    %v146 = vld [vmem:[#allocation5 + $0x160] sm:$0xff]
    %v147 = vld [vmem:[#allocation5 + $0x168] sm:$0xff]
    %v148 = vld [vmem:[#allocation5 + $0x170] sm:$0xff]
    %v149 = vld [vmem:[#allocation5 + $0x178] sm:$0xff]
    %v150 = vld [vmem:[#allocation5 + $0x180] sm:$0xff]
    %v151 = vld [vmem:[#allocation5 + $0x188] sm:$0xff]
    %v152 = vld [vmem:[#allocation5 + $0x190] sm:$0xff]
    %v153 = vld [vmem:[#allocation5 + $0x198] sm:$0xff]
    %v154 = vld [vmem:[#allocation5 + $0x1a0] sm:$0xff]
    %v155 = vld [vmem:[#allocation5 + $0x1a8] sm:$0xff]
    %v156 = vld [vmem:[#allocation5 + $0x1b0] sm:$0xff]
    %v157 = vld [vmem:[#allocation5 + $0x1b8] sm:$0xff]
    %v158 = vld [vmem:[#allocation5 + $0x1c0] sm:$0xff]
    %v159 = vld [vmem:[#allocation5 + $0x1c8] sm:$0xff]
    %v160 = vld [vmem:[#allocation5 + $0x1d0] sm:$0xff]
    %v161 = vld [vmem:[#allocation5 + $0x1d8] sm:$0xff]
    %v162 = vld [vmem:[#allocation5 + $0x1e0] sm:$0xff]
    %v163 = vld [vmem:[#allocation5 + $0x1e8] sm:$0xff]
    %v164 = vld [vmem:[#allocation5 + $0x1f0] sm:$0xff]
    %v165 = vld [vmem:[#allocation5 + $0x1f8] sm:$0xff]
    %v166 = vld [vmem:[#allocation5 + $0x200] sm:$0xff]
    %v167 = vld [vmem:[#allocation5 + $0x208] sm:$0xff]
    %v168 = vld [vmem:[#allocation5 + $0x210] sm:$0xff]
    %v169 = vld [vmem:[#allocation5 + $0x218] sm:$0xff]
    %v170 = vld [vmem:[#allocation5 + $0x220] sm:$0xff]
    %v171 = vld [vmem:[#allocation5 + $0x228] sm:$0xff]
    %v172 = vld [vmem:[#allocation5 + $0x230] sm:$0xff]
    %v173 = vld [vmem:[#allocation5 + $0x238] sm:$0xff]
    %v174 = vld [vmem:[#allocation5 + $0x240] sm:$0xff]
    %v175 = vld [vmem:[#allocation5 + $0x248] sm:$0xff]
    %v176 = vld [vmem:[#allocation5 + $0x250] sm:$0xff]
    %v177 = vld [vmem:[#allocation5 + $0x258] sm:$0xff]
    %v178 = vld [vmem:[#allocation5 + $0x260] sm:$0xff]
    %v179 = vld [vmem:[#allocation5 + $0x268] sm:$0xff]
    %v180 = vld [vmem:[#allocation5 + $0x270] sm:$0xff]
    %v181 = vld [vmem:[#allocation5 + $0x278] sm:$0xff]
    %v182 = vld [vmem:[#allocation5 + $0x280] sm:$0xff]
    %v183 = vld [vmem:[#allocation5 + $0x288] sm:$0xff]
    %v184 = vld [vmem:[#allocation5 + $0x290] sm:$0xff]
    %v185 = vld [vmem:[#allocation5 + $0x298] sm:$0xff]
    %v186 = vld [vmem:[#allocation5 + $0x2a0] sm:$0xff]
    %v187 = vld [vmem:[#allocation5 + $0x2a8] sm:$0xff]
    %v188 = vld [vmem:[#allocation5 + $0x2b0] sm:$0xff]
    %v189 = vld [vmem:[#allocation5 + $0x2b8] sm:$0xff]
    %v190 = vld [vmem:[#allocation5 + $0x2c0] sm:$0xff]
    %v191 = vld [vmem:[#allocation5 + $0x2c8] sm:$0xff]
    %v192 = vld [vmem:[#allocation5 + $0x2d0] sm:$0xff]
    %v193 = vld [vmem:[#allocation5 + $0x2d8] sm:$0xff]
    %v194 = vld [vmem:[#allocation5 + $0x2e0] sm:$0xff]
    %v195 = vld [vmem:[#allocation5 + $0x2e8] sm:$0xff]
    %v196 = vld [vmem:[#allocation5 + $0x2f0] sm:$0xff]
    %v197 = vld [vmem:[#allocation5 + $0x2f8] sm:$0xff]
    %v198 = vld [vmem:[#allocation5 + $0x300] sm:$0xff]
    %v199 = vld [vmem:[#allocation5 + $0x308] sm:$0xff]
    %v200 = vld [vmem:[#allocation5 + $0x310] sm:$0xff]
    %v201 = vld [vmem:[#allocation5 + $0x318] sm:$0xff]
    %v202 = vld [vmem:[#allocation5 + $0x320] sm:$0xff]
    %v203 = vld [vmem:[#allocation5 + $0x328] sm:$0xff]
    %v204 = vld [vmem:[#allocation5 + $0x330] sm:$0xff]
    %v205 = vld [vmem:[#allocation5 + $0x338] sm:$0xff]
    %v206 = vld [vmem:[#allocation5 + $0x340] sm:$0xff]
    %v207 = vld [vmem:[#allocation5 + $0x348] sm:$0xff]
    %v208 = vld [vmem:[#allocation5 + $0x350] sm:$0xff]
    %v209 = vld [vmem:[#allocation5 + $0x358] sm:$0xff]
    %v210 = vld [vmem:[#allocation5 + $0x360] sm:$0xff]
    %v211 = vld [vmem:[#allocation5 + $0x368] sm:$0xff]
    %v212 = vld [vmem:[#allocation5 + $0x370] sm:$0xff]
    %v213 = vld [vmem:[#allocation5 + $0x378] sm:$0xff]
    %v214 = vld [vmem:[#allocation5 + $0x380] sm:$0xff]
    %v215 = vld [vmem:[#allocation5 + $0x388] sm:$0xff]
    %v216 = vld [vmem:[#allocation5 + $0x390] sm:$0xff]
    %v217 = vld [vmem:[#allocation5 + $0x398] sm:$0xff]
    %v218 = vld [vmem:[#allocation5 + $0x3a0] sm:$0xff]
    %v219 = vld [vmem:[#allocation5 + $0x3a8] sm:$0xff]
    %v220 = vld [vmem:[#allocation5 + $0x3b0] sm:$0xff]
    %v221 = vld [vmem:[#allocation5 + $0x3b8] sm:$0xff]
    %v222 = vld [vmem:[#allocation5 + $0x3c0] sm:$0xff]
    %v223 = vld [vmem:[#allocation5 + $0x3c8] sm:$0xff]
    %v224 = vld [vmem:[#allocation5 + $0x3d0] sm:$0xff]
    %v225 = vld [vmem:[#allocation5 + $0x3d8] sm:$0xff]
    %v226 = vld [vmem:[#allocation5 + $0x3e0] sm:$0xff]
    %v227 = vld [vmem:[#allocation5 + $0x3e8] sm:$0xff]
    %v228 = vld [vmem:[#allocation5 + $0x3f0] sm:$0xff]
    %v229 = vld [vmem:[#allocation5 + $0x3f8] sm:$0xff]
    %v230 = vld [vmem:[#allocation7] sm:$0xff]
    %v232 = vperm.slane %v230, 0
    %v233 = vperm.slane %v230, 1
    %v234 = vperm.slane %v230, 2
    %v235 = vperm.slane %v230, 3
    %v236 = vperm.slane %v230, 4
    %v237 = vperm.slane %v230, 5
    %v238 = vperm.slane %v230, 6
    %v239 = vperm.slane %v230, 7
    %v249 = vunpack.c.l.b16 %v101
    %v250 = vunpack.c.h.b16 %v101
    %v251 = vpack.c.b16 %v249, %v249
    %v252 = vpack.c.b16 %v250, %v250
    %v383 = vunpack.c.l.b16 %v102
    %v384 = vunpack.c.h.b16 %v102
    %v385 = vunpack.c.l.b16 %v103
    %v386 = vunpack.c.h.b16 %v103
    %v387 = vunpack.c.l.b16 %v104
    %v388 = vunpack.c.h.b16 %v104
    %v389 = vunpack.c.l.b16 %v105
    %v390 = vunpack.c.h.b16 %v105
    %v391 = vunpack.c.l.b16 %v106
    %v392 = vunpack.c.h.b16 %v106
    %v393 = vunpack.c.l.b16 %v107
    %v394 = vunpack.c.h.b16 %v107
    %v395 = vunpack.c.l.b16 %v108
    %v396 = vunpack.c.h.b16 %v108
    %v397 = vunpack.c.l.b16 %v109
    %v398 = vunpack.c.h.b16 %v109
    %v399 = vunpack.c.l.b16 %v110
    %v400 = vunpack.c.h.b16 %v110
    %v401 = vunpack.c.l.b16 %v111
    %v402 = vunpack.c.h.b16 %v111
    %v403 = vunpack.c.l.b16 %v112
    %v404 = vunpack.c.h.b16 %v112
    %v405 = vunpack.c.l.b16 %v113
    %v406 = vunpack.c.h.b16 %v113
    %v407 = vunpack.c.l.b16 %v114
    %v408 = vunpack.c.h.b16 %v114
    %v409 = vunpack.c.l.b16 %v115
    %v410 = vunpack.c.h.b16 %v115
    %v411 = vunpack.c.l.b16 %v116
    %v412 = vunpack.c.h.b16 %v116
    %v413 = vunpack.c.l.b16 %v117
    %v414 = vunpack.c.h.b16 %v117
    %v415 = vunpack.c.l.b16 %v118
    %v416 = vunpack.c.h.b16 %v118
    %v417 = vunpack.c.l.b16 %v119
    %v418 = vunpack.c.h.b16 %v119
    %v419 = vunpack.c.l.b16 %v120
    %v420 = vunpack.c.h.b16 %v120
    %v421 = vunpack.c.l.b16 %v121
    %v422 = vunpack.c.h.b16 %v121
    %v423 = vunpack.c.l.b16 %v122
    %v424 = vunpack.c.h.b16 %v122
    %v425 = vunpack.c.l.b16 %v123
    %v426 = vunpack.c.h.b16 %v123
    %v427 = vunpack.c.l.b16 %v124
    %v428 = vunpack.c.h.b16 %v124
    %v429 = vunpack.c.l.b16 %v125
    %v430 = vunpack.c.h.b16 %v125
    %v431 = vunpack.c.l.b16 %v126
    %v432 = vunpack.c.h.b16 %v126
    %v433 = vunpack.c.l.b16 %v127
    %v434 = vunpack.c.h.b16 %v127
    %v435 = vunpack.c.l.b16 %v128
    %v436 = vunpack.c.h.b16 %v128
    %v437 = vunpack.c.l.b16 %v129
    %v438 = vunpack.c.h.b16 %v129
    %v439 = vunpack.c.l.b16 %v130
    %v440 = vunpack.c.h.b16 %v130
    %v441 = vunpack.c.l.b16 %v131
    %v442 = vunpack.c.h.b16 %v131
    %v443 = vunpack.c.l.b16 %v132
    %v444 = vunpack.c.h.b16 %v132
    %v445 = vunpack.c.l.b16 %v133
    %v446 = vunpack.c.h.b16 %v133
    %v447 = vunpack.c.l.b16 %v134
    %v448 = vunpack.c.h.b16 %v134
    %v449 = vunpack.c.l.b16 %v135
    %v450 = vunpack.c.h.b16 %v135
    %v451 = vunpack.c.l.b16 %v136
    %v452 = vunpack.c.h.b16 %v136
    %v453 = vunpack.c.l.b16 %v137
    %v454 = vunpack.c.h.b16 %v137
    %v455 = vunpack.c.l.b16 %v138
    %v456 = vunpack.c.h.b16 %v138
    %v457 = vunpack.c.l.b16 %v139
    %v458 = vunpack.c.h.b16 %v139
    %v459 = vunpack.c.l.b16 %v140
    %v460 = vunpack.c.h.b16 %v140
    %v461 = vunpack.c.l.b16 %v141
    %v462 = vunpack.c.h.b16 %v141
    %v463 = vunpack.c.l.b16 %v142
    %v464 = vunpack.c.h.b16 %v142
    %v465 = vunpack.c.l.b16 %v143
    %v466 = vunpack.c.h.b16 %v143
    %v467 = vunpack.c.l.b16 %v144
    %v468 = vunpack.c.h.b16 %v144
    %v469 = vunpack.c.l.b16 %v145
    %v470 = vunpack.c.h.b16 %v145
    %v471 = vunpack.c.l.b16 %v146
    %v472 = vunpack.c.h.b16 %v146
    %v473 = vunpack.c.l.b16 %v147
    %v474 = vunpack.c.h.b16 %v147
    %v475 = vunpack.c.l.b16 %v148
    %v476 = vunpack.c.h.b16 %v148
    %v477 = vunpack.c.l.b16 %v149
    %v478 = vunpack.c.h.b16 %v149
    %v479 = vunpack.c.l.b16 %v150
    %v480 = vunpack.c.h.b16 %v150
    %v481 = vunpack.c.l.b16 %v151
    %v482 = vunpack.c.h.b16 %v151
    %v483 = vunpack.c.l.b16 %v152
    %v484 = vunpack.c.h.b16 %v152
    %v485 = vunpack.c.l.b16 %v153
    %v486 = vunpack.c.h.b16 %v153
    %v487 = vunpack.c.l.b16 %v154
    %v488 = vunpack.c.h.b16 %v154
    %v489 = vunpack.c.l.b16 %v155
    %v490 = vunpack.c.h.b16 %v155
    %v491 = vunpack.c.l.b16 %v156
    %v492 = vunpack.c.h.b16 %v156
    %v493 = vunpack.c.l.b16 %v157
    %v494 = vunpack.c.h.b16 %v157
    %v495 = vunpack.c.l.b16 %v158
    %v496 = vunpack.c.h.b16 %v158
    %v497 = vunpack.c.l.b16 %v159
    %v498 = vunpack.c.h.b16 %v159
    %v499 = vunpack.c.l.b16 %v160
    %v500 = vunpack.c.h.b16 %v160
    %v501 = vunpack.c.l.b16 %v161
    %v502 = vunpack.c.h.b16 %v161
    %v503 = vunpack.c.l.b16 %v162
    %v504 = vunpack.c.h.b16 %v162
    %v505 = vunpack.c.l.b16 %v163
    %v506 = vunpack.c.h.b16 %v163
    %v507 = vunpack.c.l.b16 %v164
    %v508 = vunpack.c.h.b16 %v164
    %v509 = vunpack.c.l.b16 %v165
    %v510 = vunpack.c.h.b16 %v165
    %v511 = vunpack.c.l.b16 %v166
    %v512 = vunpack.c.h.b16 %v166
    %v513 = vunpack.c.l.b16 %v167
    %v514 = vunpack.c.h.b16 %v167
    %v515 = vunpack.c.l.b16 %v168
    %v516 = vunpack.c.h.b16 %v168
    %v517 = vunpack.c.l.b16 %v169
    %v518 = vunpack.c.h.b16 %v169
    %v519 = vunpack.c.l.b16 %v170
    %v520 = vunpack.c.h.b16 %v170
    %v521 = vunpack.c.l.b16 %v171
    %v522 = vunpack.c.h.b16 %v171
    %v523 = vunpack.c.l.b16 %v172
    %v524 = vunpack.c.h.b16 %v172
    %v525 = vunpack.c.l.b16 %v173
    %v526 = vunpack.c.h.b16 %v173
    %v527 = vunpack.c.l.b16 %v174
    %v528 = vunpack.c.h.b16 %v174
    %v529 = vunpack.c.l.b16 %v175
    %v530 = vunpack.c.h.b16 %v175
    %v531 = vunpack.c.l.b16 %v176
    %v532 = vunpack.c.h.b16 %v176
    %v533 = vunpack.c.l.b16 %v177
    %v534 = vunpack.c.h.b16 %v177
    %v535 = vunpack.c.l.b16 %v178
    %v536 = vunpack.c.h.b16 %v178
    %v537 = vunpack.c.l.b16 %v179
    %v538 = vunpack.c.h.b16 %v179
    %v539 = vunpack.c.l.b16 %v180
    %v540 = vunpack.c.h.b16 %v180
    %v541 = vunpack.c.l.b16 %v181
    %v542 = vunpack.c.h.b16 %v181
    %v543 = vunpack.c.l.b16 %v182
    %v544 = vunpack.c.h.b16 %v182
    %v545 = vunpack.c.l.b16 %v183
    %v546 = vunpack.c.h.b16 %v183
    %v547 = vunpack.c.l.b16 %v184
    %v548 = vunpack.c.h.b16 %v184
    %v549 = vunpack.c.l.b16 %v185
    %v550 = vunpack.c.h.b16 %v185
    %v551 = vunpack.c.l.b16 %v186
    %v552 = vunpack.c.h.b16 %v186
    %v553 = vunpack.c.l.b16 %v187
    %v554 = vunpack.c.h.b16 %v187
    %v555 = vunpack.c.l.b16 %v188
    %v556 = vunpack.c.h.b16 %v188
    %v557 = vunpack.c.l.b16 %v189
    %v558 = vunpack.c.h.b16 %v189
    %v559 = vunpack.c.l.b16 %v190
    %v560 = vunpack.c.h.b16 %v190
    %v561 = vunpack.c.l.b16 %v191
    %v562 = vunpack.c.h.b16 %v191
    %v563 = vunpack.c.l.b16 %v192
    %v564 = vunpack.c.h.b16 %v192
    %v565 = vunpack.c.l.b16 %v193
    %v566 = vunpack.c.h.b16 %v193
    %v567 = vunpack.c.l.b16 %v194
    %v568 = vunpack.c.h.b16 %v194
    %v569 = vunpack.c.l.b16 %v195
    %v570 = vunpack.c.h.b16 %v195
    %v571 = vunpack.c.l.b16 %v196
    %v572 = vunpack.c.h.b16 %v196
    %v573 = vunpack.c.l.b16 %v197
    %v574 = vunpack.c.h.b16 %v197
    %v575 = vunpack.c.l.b16 %v198
    %v576 = vunpack.c.h.b16 %v198
    %v577 = vunpack.c.l.b16 %v199
    %v578 = vunpack.c.h.b16 %v199
    %v579 = vunpack.c.l.b16 %v200
    %v580 = vunpack.c.h.b16 %v200
    %v581 = vunpack.c.l.b16 %v201
    %v582 = vunpack.c.h.b16 %v201
    %v583 = vunpack.c.l.b16 %v202
    %v584 = vunpack.c.h.b16 %v202
    %v585 = vunpack.c.l.b16 %v203
    %v586 = vunpack.c.h.b16 %v203
    %v587 = vunpack.c.l.b16 %v204
    %v588 = vunpack.c.h.b16 %v204
    %v589 = vunpack.c.l.b16 %v205
    %v590 = vunpack.c.h.b16 %v205
    %v591 = vunpack.c.l.b16 %v206
    %v592 = vunpack.c.h.b16 %v206
    %v593 = vunpack.c.l.b16 %v207
    %v594 = vunpack.c.h.b16 %v207
    %v595 = vunpack.c.l.b16 %v208
    %v596 = vunpack.c.h.b16 %v208
    %v597 = vunpack.c.l.b16 %v209
    %v598 = vunpack.c.h.b16 %v209
    %v599 = vunpack.c.l.b16 %v210
    %v600 = vunpack.c.h.b16 %v210
    %v601 = vunpack.c.l.b16 %v211
    %v602 = vunpack.c.h.b16 %v211
    %v603 = vunpack.c.l.b16 %v212
    %v604 = vunpack.c.h.b16 %v212
    %v605 = vunpack.c.l.b16 %v213
    %v606 = vunpack.c.h.b16 %v213
    %v607 = vunpack.c.l.b16 %v214
    %v608 = vunpack.c.h.b16 %v214
    %v609 = vunpack.c.l.b16 %v215
    %v610 = vunpack.c.h.b16 %v215
    %v611 = vunpack.c.l.b16 %v216
    %v612 = vunpack.c.h.b16 %v216
    %v613 = vunpack.c.l.b16 %v217
    %v614 = vunpack.c.h.b16 %v217
    %v615 = vunpack.c.l.b16 %v218
    %v616 = vunpack.c.h.b16 %v218
    %v617 = vunpack.c.l.b16 %v219
    %v618 = vunpack.c.h.b16 %v219
    %v619 = vunpack.c.l.b16 %v220
    %v620 = vunpack.c.h.b16 %v220
    %v621 = vunpack.c.l.b16 %v221
    %v622 = vunpack.c.h.b16 %v221
    %v623 = vunpack.c.l.b16 %v222
    %v624 = vunpack.c.h.b16 %v222
    %v625 = vunpack.c.l.b16 %v223
    %v626 = vunpack.c.h.b16 %v223
    %v627 = vunpack.c.l.b16 %v224
    %v628 = vunpack.c.h.b16 %v224
    %v629 = vunpack.c.l.b16 %v225
    %v630 = vunpack.c.h.b16 %v225
    %v631 = vunpack.c.l.b16 %v226
    %v632 = vunpack.c.h.b16 %v226
    %v633 = vunpack.c.l.b16 %v227
    %v634 = vunpack.c.h.b16 %v227
    %v635 = vunpack.c.l.b16 %v228
    %v636 = vunpack.c.h.b16 %v228
    %v637 = vunpack.c.l.b16 %v229
    %v638 = vunpack.c.h.b16 %v229
    %v639 = vpack.c.b16 %v391, %v383
    %v640 = vpack.c.b16 %v392, %v384
    %v641 = vpack.c.b16 %v393, %v385
    %v642 = vpack.c.b16 %v394, %v386
    %v643 = vpack.c.b16 %v395, %v387
    %v644 = vpack.c.b16 %v396, %v388
    %v645 = vpack.c.b16 %v397, %v389
    %v646 = vpack.c.b16 %v398, %v390
    %v647 = vpack.c.b16 %v407, %v399
    %v648 = vpack.c.b16 %v408, %v400
    %v649 = vpack.c.b16 %v409, %v401
    %v650 = vpack.c.b16 %v410, %v402
    %v651 = vpack.c.b16 %v411, %v403
    %v652 = vpack.c.b16 %v412, %v404
    %v653 = vpack.c.b16 %v413, %v405
    %v654 = vpack.c.b16 %v414, %v406
    %v655 = vpack.c.b16 %v423, %v415
    %v656 = vpack.c.b16 %v424, %v416
    %v657 = vpack.c.b16 %v425, %v417
    %v658 = vpack.c.b16 %v426, %v418
    %v659 = vpack.c.b16 %v427, %v419
    %v660 = vpack.c.b16 %v428, %v420
    %v661 = vpack.c.b16 %v429, %v421
    %v662 = vpack.c.b16 %v430, %v422
    %v663 = vpack.c.b16 %v439, %v431
    %v664 = vpack.c.b16 %v440, %v432
    %v665 = vpack.c.b16 %v441, %v433
    %v666 = vpack.c.b16 %v442, %v434
    %v667 = vpack.c.b16 %v443, %v435
    %v668 = vpack.c.b16 %v444, %v436
    %v669 = vpack.c.b16 %v445, %v437
    %v670 = vpack.c.b16 %v446, %v438
    %v671 = vpack.c.b16 %v455, %v447
    %v672 = vpack.c.b16 %v456, %v448
    %v673 = vpack.c.b16 %v457, %v449
    %v674 = vpack.c.b16 %v458, %v450
    %v675 = vpack.c.b16 %v459, %v451
    %v676 = vpack.c.b16 %v460, %v452
    %v677 = vpack.c.b16 %v461, %v453
    %v678 = vpack.c.b16 %v462, %v454
    %v679 = vpack.c.b16 %v471, %v463
    %v680 = vpack.c.b16 %v472, %v464
    %v681 = vpack.c.b16 %v473, %v465
    %v682 = vpack.c.b16 %v474, %v466
    %v683 = vpack.c.b16 %v475, %v467
    %v684 = vpack.c.b16 %v476, %v468
    %v685 = vpack.c.b16 %v477, %v469
    %v686 = vpack.c.b16 %v478, %v470
    %v687 = vpack.c.b16 %v487, %v479
    %v688 = vpack.c.b16 %v488, %v480
    %v689 = vpack.c.b16 %v489, %v481
    %v690 = vpack.c.b16 %v490, %v482
    %v691 = vpack.c.b16 %v491, %v483
    %v692 = vpack.c.b16 %v492, %v484
    %v693 = vpack.c.b16 %v493, %v485
    %v694 = vpack.c.b16 %v494, %v486
    %v695 = vpack.c.b16 %v503, %v495
    %v696 = vpack.c.b16 %v504, %v496
    %v697 = vpack.c.b16 %v505, %v497
    %v698 = vpack.c.b16 %v506, %v498
    %v699 = vpack.c.b16 %v507, %v499
    %v700 = vpack.c.b16 %v508, %v500
    %v701 = vpack.c.b16 %v509, %v501
    %v702 = vpack.c.b16 %v510, %v502
    %v703 = vpack.c.b16 %v519, %v511
    %v704 = vpack.c.b16 %v520, %v512
    %v705 = vpack.c.b16 %v521, %v513
    %v706 = vpack.c.b16 %v522, %v514
    %v707 = vpack.c.b16 %v523, %v515
    %v708 = vpack.c.b16 %v524, %v516
    %v709 = vpack.c.b16 %v525, %v517
    %v710 = vpack.c.b16 %v526, %v518
    %v711 = vpack.c.b16 %v535, %v527
    %v712 = vpack.c.b16 %v536, %v528
    %v713 = vpack.c.b16 %v537, %v529
    %v714 = vpack.c.b16 %v538, %v530
    %v715 = vpack.c.b16 %v539, %v531
    %v716 = vpack.c.b16 %v540, %v532
    %v717 = vpack.c.b16 %v541, %v533
    %v718 = vpack.c.b16 %v542, %v534
    %v719 = vpack.c.b16 %v551, %v543
    %v720 = vpack.c.b16 %v552, %v544
    %v721 = vpack.c.b16 %v553, %v545
    %v722 = vpack.c.b16 %v554, %v546
    %v723 = vpack.c.b16 %v555, %v547
    %v724 = vpack.c.b16 %v556, %v548
    %v725 = vpack.c.b16 %v557, %v549
    %v726 = vpack.c.b16 %v558, %v550
    %v727 = vpack.c.b16 %v567, %v559
    %v728 = vpack.c.b16 %v568, %v560
    %v729 = vpack.c.b16 %v569, %v561
    %v730 = vpack.c.b16 %v570, %v562
    %v731 = vpack.c.b16 %v571, %v563
    %v732 = vpack.c.b16 %v572, %v564
    %v733 = vpack.c.b16 %v573, %v565
    %v734 = vpack.c.b16 %v574, %v566
    %v735 = vpack.c.b16 %v583, %v575
    %v736 = vpack.c.b16 %v584, %v576
    %v737 = vpack.c.b16 %v585, %v577
    %v738 = vpack.c.b16 %v586, %v578
    %v739 = vpack.c.b16 %v587, %v579
    %v740 = vpack.c.b16 %v588, %v580
    %v741 = vpack.c.b16 %v589, %v581
    %v742 = vpack.c.b16 %v590, %v582
    %v743 = vpack.c.b16 %v599, %v591
    %v744 = vpack.c.b16 %v600, %v592
    %v745 = vpack.c.b16 %v601, %v593
    %v746 = vpack.c.b16 %v602, %v594
    %v747 = vpack.c.b16 %v603, %v595
    %v748 = vpack.c.b16 %v604, %v596
    %v749 = vpack.c.b16 %v605, %v597
    %v750 = vpack.c.b16 %v606, %v598
    %v751 = vpack.c.b16 %v615, %v607
    %v752 = vpack.c.b16 %v616, %v608
    %v753 = vpack.c.b16 %v617, %v609
    %v754 = vpack.c.b16 %v618, %v610
    %v755 = vpack.c.b16 %v619, %v611
    %v756 = vpack.c.b16 %v620, %v612
    %v757 = vpack.c.b16 %v621, %v613
    %v758 = vpack.c.b16 %v622, %v614
    %v759 = vpack.c.b16 %v631, %v623
    %v760 = vpack.c.b16 %v632, %v624
    %v761 = vpack.c.b16 %v633, %v625
    %v762 = vpack.c.b16 %v634, %v626
    %v763 = vpack.c.b16 %v635, %v627
    %v764 = vpack.c.b16 %v636, %v628
    %v765 = vpack.c.b16 %v637, %v629
    %v766 = vpack.c.b16 %v638, %v630
    %895 = vmatpush.bf16.msra.mxu0 %v695
    %896 = vmatpush.bf16.msra.mxu0 %v687
    %897 = vmatpush.bf16.msra.mxu0 %v679
    %898 = vmatpush.bf16.msra.mxu0 %v671
    %899 = vmatpush.bf16.msra.mxu0 %v663
    %900 = vmatpush.bf16.msra.mxu0 %v655
    %901 = vmatpush.bf16.msra.mxu0 %v647
    %902 = vmatpush.bf16.msra.mxu0 %v639
    %903 = vmatmul.bf16.gmra.mxu0 %v251
    %v904 = vpop.f32.mrf.mxu0
    %v905 = vadd.f32 %v232, %v904
    %v906 = vpop.f32.mrf.mxu0
    %907 = vdwg.mxu0
    %908 = vmatpush.bf16.msra.mxu0 %v759
    %909 = vmatpush.bf16.msra.mxu0 %v751
    %910 = vmatpush.bf16.msra.mxu0 %v743
    %911 = vmatpush.bf16.msra.mxu0 %v735
    %912 = vmatpush.bf16.msra.mxu0 %v727
    %913 = vmatpush.bf16.msra.mxu0 %v719
    %914 = vmatpush.bf16.msra.mxu0 %v711
    %915 = vmatpush.bf16.msra.mxu0 %v703
    %916 = vmatmul.bf16.gmra.mxu0 %v252
    %v917 = vpop.f32.mrf.mxu0
    %v918 = vadd.f32 %v905, %v917
    %v919 = vpop.f32.mrf.mxu0
    %920 = vdwg.mxu0
    %921 = vmatpush.bf16.msra.mxu0 %v696
    %922 = vmatpush.bf16.msra.mxu0 %v688
    %923 = vmatpush.bf16.msra.mxu0 %v680
    %924 = vmatpush.bf16.msra.mxu0 %v672
    %925 = vmatpush.bf16.msra.mxu0 %v664
    %926 = vmatpush.bf16.msra.mxu0 %v656
    %927 = vmatpush.bf16.msra.mxu0 %v648
    %928 = vmatpush.bf16.msra.mxu0 %v640
    %929 = vmatmul.bf16.gmra.mxu0 %v251
    %v930 = vpop.f32.mrf.mxu0
    %v931 = vadd.f32 %v233, %v930
    %v932 = vpop.f32.mrf.mxu0
    %933 = vdwg.mxu0
    %934 = vmatpush.bf16.msra.mxu0 %v760
    %935 = vmatpush.bf16.msra.mxu0 %v752
    %936 = vmatpush.bf16.msra.mxu0 %v744
    %937 = vmatpush.bf16.msra.mxu0 %v736
    %938 = vmatpush.bf16.msra.mxu0 %v728
    %939 = vmatpush.bf16.msra.mxu0 %v720
    %940 = vmatpush.bf16.msra.mxu0 %v712
    %941 = vmatpush.bf16.msra.mxu0 %v704
    %942 = vmatmul.bf16.gmra.mxu0 %v252
    %v943 = vpop.f32.mrf.mxu0
    %v944 = vadd.f32 %v931, %v943
    %v945 = vpop.f32.mrf.mxu0
    %946 = vdwg.mxu0
    %947 = vmatpush.bf16.msra.mxu0 %v697
    %948 = vmatpush.bf16.msra.mxu0 %v689
    %949 = vmatpush.bf16.msra.mxu0 %v681
    %950 = vmatpush.bf16.msra.mxu0 %v673
    %951 = vmatpush.bf16.msra.mxu0 %v665
    %952 = vmatpush.bf16.msra.mxu0 %v657
    %953 = vmatpush.bf16.msra.mxu0 %v649
    %954 = vmatpush.bf16.msra.mxu0 %v641
    %955 = vmatmul.bf16.gmra.mxu0 %v251
    %v956 = vpop.f32.mrf.mxu0
    %v957 = vadd.f32 %v234, %v956
    %v958 = vpop.f32.mrf.mxu0
    %959 = vdwg.mxu0
    %960 = vmatpush.bf16.msra.mxu0 %v761
    %961 = vmatpush.bf16.msra.mxu0 %v753
    %962 = vmatpush.bf16.msra.mxu0 %v745
    %963 = vmatpush.bf16.msra.mxu0 %v737
    %964 = vmatpush.bf16.msra.mxu0 %v729
    %965 = vmatpush.bf16.msra.mxu0 %v721
    %966 = vmatpush.bf16.msra.mxu0 %v713
    %967 = vmatpush.bf16.msra.mxu0 %v705
    %968 = vmatmul.bf16.gmra.mxu0 %v252
    %v969 = vpop.f32.mrf.mxu0
    %v970 = vadd.f32 %v957, %v969
    %v971 = vpop.f32.mrf.mxu0
    %972 = vdwg.mxu0
    %973 = vmatpush.bf16.msra.mxu0 %v698
    %974 = vmatpush.bf16.msra.mxu0 %v690
    %975 = vmatpush.bf16.msra.mxu0 %v682
    %976 = vmatpush.bf16.msra.mxu0 %v674
    %977 = vmatpush.bf16.msra.mxu0 %v666
    %978 = vmatpush.bf16.msra.mxu0 %v658
    %979 = vmatpush.bf16.msra.mxu0 %v650
    %980 = vmatpush.bf16.msra.mxu0 %v642
    %981 = vmatmul.bf16.gmra.mxu0 %v251
    %v982 = vpop.f32.mrf.mxu0
    %v983 = vadd.f32 %v235, %v982
    %v984 = vpop.f32.mrf.mxu0
    %985 = vdwg.mxu0
    %986 = vmatpush.bf16.msra.mxu0 %v762
    %987 = vmatpush.bf16.msra.mxu0 %v754
    %988 = vmatpush.bf16.msra.mxu0 %v746
    %989 = vmatpush.bf16.msra.mxu0 %v738
    %990 = vmatpush.bf16.msra.mxu0 %v730
    %991 = vmatpush.bf16.msra.mxu0 %v722
    %992 = vmatpush.bf16.msra.mxu0 %v714
    %993 = vmatpush.bf16.msra.mxu0 %v706
    %994 = vmatmul.bf16.gmra.mxu0 %v252
    %v995 = vpop.f32.mrf.mxu0
    %v996 = vadd.f32 %v983, %v995
    %v997 = vpop.f32.mrf.mxu0
    %998 = vdwg.mxu0
    %999 = vmatpush.bf16.msra.mxu0 %v699
    %1000 = vmatpush.bf16.msra.mxu0 %v691
    %1001 = vmatpush.bf16.msra.mxu0 %v683
    %1002 = vmatpush.bf16.msra.mxu0 %v675
    %1003 = vmatpush.bf16.msra.mxu0 %v667
    %1004 = vmatpush.bf16.msra.mxu0 %v659
    %1005 = vmatpush.bf16.msra.mxu0 %v651
    %1006 = vmatpush.bf16.msra.mxu0 %v643
    %1007 = vmatmul.bf16.gmra.mxu0 %v251
    %v1008 = vpop.f32.mrf.mxu0
    %v1009 = vadd.f32 %v236, %v1008
    %v1010 = vpop.f32.mrf.mxu0
    %1011 = vdwg.mxu0
    %1012 = vmatpush.bf16.msra.mxu0 %v763
    %1013 = vmatpush.bf16.msra.mxu0 %v755
    %1014 = vmatpush.bf16.msra.mxu0 %v747
    %1015 = vmatpush.bf16.msra.mxu0 %v739
    %1016 = vmatpush.bf16.msra.mxu0 %v731
    %1017 = vmatpush.bf16.msra.mxu0 %v723
    %1018 = vmatpush.bf16.msra.mxu0 %v715
    %1019 = vmatpush.bf16.msra.mxu0 %v707
    %1020 = vmatmul.bf16.gmra.mxu0 %v252
    %v1021 = vpop.f32.mrf.mxu0
    %v1022 = vadd.f32 %v1009, %v1021
    %v1023 = vpop.f32.mrf.mxu0
    %1024 = vdwg.mxu0
    %1025 = vmatpush.bf16.msra.mxu0 %v700
    %1026 = vmatpush.bf16.msra.mxu0 %v692
    %1027 = vmatpush.bf16.msra.mxu0 %v684
    %1028 = vmatpush.bf16.msra.mxu0 %v676
    %1029 = vmatpush.bf16.msra.mxu0 %v668
    %1030 = vmatpush.bf16.msra.mxu0 %v660
    %1031 = vmatpush.bf16.msra.mxu0 %v652
    %1032 = vmatpush.bf16.msra.mxu0 %v644
    %1033 = vmatmul.bf16.gmra.mxu0 %v251
    %v1034 = vpop.f32.mrf.mxu0
    %v1035 = vadd.f32 %v237, %v1034
    %v1036 = vpop.f32.mrf.mxu0
    %1037 = vdwg.mxu0
    %1038 = vmatpush.bf16.msra.mxu0 %v764
    %1039 = vmatpush.bf16.msra.mxu0 %v756
    %1040 = vmatpush.bf16.msra.mxu0 %v748
    %1041 = vmatpush.bf16.msra.mxu0 %v740
    %1042 = vmatpush.bf16.msra.mxu0 %v732
    %1043 = vmatpush.bf16.msra.mxu0 %v724
    %1044 = vmatpush.bf16.msra.mxu0 %v716
    %1045 = vmatpush.bf16.msra.mxu0 %v708
    %1046 = vmatmul.bf16.gmra.mxu0 %v252
    %v1047 = vpop.f32.mrf.mxu0
    %v1048 = vadd.f32 %v1035, %v1047
    %v1049 = vpop.f32.mrf.mxu0
    %1050 = vdwg.mxu0
    %1051 = vmatpush.bf16.msra.mxu0 %v701
    %1052 = vmatpush.bf16.msra.mxu0 %v693
    %1053 = vmatpush.bf16.msra.mxu0 %v685
    %1054 = vmatpush.bf16.msra.mxu0 %v677
    %1055 = vmatpush.bf16.msra.mxu0 %v669
    %1056 = vmatpush.bf16.msra.mxu0 %v661
    %1057 = vmatpush.bf16.msra.mxu0 %v653
    %1058 = vmatpush.bf16.msra.mxu0 %v645
    %1059 = vmatmul.bf16.gmra.mxu0 %v251
    %v1060 = vpop.f32.mrf.mxu0
    %v1061 = vadd.f32 %v238, %v1060
    %v1062 = vpop.f32.mrf.mxu0
    %1063 = vdwg.mxu0
    %1064 = vmatpush.bf16.msra.mxu0 %v765
    %1065 = vmatpush.bf16.msra.mxu0 %v757
    %1066 = vmatpush.bf16.msra.mxu0 %v749
    %1067 = vmatpush.bf16.msra.mxu0 %v741
    %1068 = vmatpush.bf16.msra.mxu0 %v733
    %1069 = vmatpush.bf16.msra.mxu0 %v725
    %1070 = vmatpush.bf16.msra.mxu0 %v717
    %1071 = vmatpush.bf16.msra.mxu0 %v709
    %1072 = vmatmul.bf16.gmra.mxu0 %v252
    %v1073 = vpop.f32.mrf.mxu0
    %v1074 = vadd.f32 %v1061, %v1073
    %v1075 = vpop.f32.mrf.mxu0
    %1076 = vdwg.mxu0
    %1077 = vmatpush.bf16.msra.mxu0 %v702
    %1078 = vmatpush.bf16.msra.mxu0 %v694
    %1079 = vmatpush.bf16.msra.mxu0 %v686
    %1080 = vmatpush.bf16.msra.mxu0 %v678
    %1081 = vmatpush.bf16.msra.mxu0 %v670
    %1082 = vmatpush.bf16.msra.mxu0 %v662
    %1083 = vmatpush.bf16.msra.mxu0 %v654
    %1084 = vmatpush.bf16.msra.mxu0 %v646
    %1085 = vmatmul.bf16.gmra.mxu0 %v251
    %v1086 = vpop.f32.mrf.mxu0
    %v1087 = vadd.f32 %v239, %v1086
    %v1088 = vpop.f32.mrf.mxu0
    %1089 = vdwg.mxu0
    %1090 = vmatpush.bf16.msra.mxu0 %v766
    %1091 = vmatpush.bf16.msra.mxu0 %v758
    %1092 = vmatpush.bf16.msra.mxu0 %v750
    %1093 = vmatpush.bf16.msra.mxu0 %v742
    %1094 = vmatpush.bf16.msra.mxu0 %v734
    %1095 = vmatpush.bf16.msra.mxu0 %v726
    %1096 = vmatpush.bf16.msra.mxu0 %v718
    %1097 = vmatpush.bf16.msra.mxu0 %v710
    %1098 = vmatmul.bf16.gmra.mxu0 %v252
    %v1099 = vpop.f32.mrf.mxu0
    %v1100 = vadd.f32 %v1087, %v1099
    %v1101 = vpop.f32.mrf.mxu0
    %1102 = vdwg.mxu0
    %v1103 = vmax.f32 %v918, 0.0
    %v1104 = vmax.f32 %v944, 0.0
    %v1105 = vmax.f32 %v970, 0.0
    %v1106 = vmax.f32 %v996, 0.0
    %v1107 = vmax.f32 %v1022, 0.0
    %v1108 = vmax.f32 %v1048, 0.0
    %v1109 = vmax.f32 %v1074, 0.0
    %v1110 = vmax.f32 %v1100, 0.0
    %v1111 = vpack.c.bf16 %v1103, %v1103
    %v1112 = vpack.c.bf16 %v1104, %v1104
    %v1113 = vpack.c.bf16 %v1105, %v1105
    %v1114 = vpack.c.bf16 %v1106, %v1106
    %v1115 = vpack.c.bf16 %v1107, %v1107
    %v1116 = vpack.c.bf16 %v1108, %v1108
    %v1117 = vpack.c.bf16 %v1109, %v1109
    %v1118 = vpack.c.bf16 %v1110, %v1110
    %v1119 = vld [vmem:[#allocation8] sm:$0xff]
    %v1120 = vld [vmem:[#allocation8 + $0x8] sm:$0xff]
    %v1121 = vld [vmem:[#allocation8 + $0x10] sm:$0xff]
    %v1122 = vld [vmem:[#allocation8 + $0x18] sm:$0xff]
    %v1123 = vld [vmem:[#allocation8 + $0x20] sm:$0xff]
    %v1124 = vld [vmem:[#allocation8 + $0x28] sm:$0xff]
    %v1125 = vld [vmem:[#allocation8 + $0x30] sm:$0xff]
    %v1126 = vld [vmem:[#allocation8 + $0x38] sm:$0xff]
    %v1127 = vld [vmem:[#allocation8 + $0x40] sm:$0xff]
    %v1128 = vld [vmem:[#allocation8 + $0x48] sm:$0xff]
    %v1129 = vld [vmem:[#allocation8 + $0x50] sm:$0xff]
    %v1130 = vld [vmem:[#allocation8 + $0x58] sm:$0xff]
    %v1131 = vld [vmem:[#allocation8 + $0x60] sm:$0xff]
    %v1132 = vld [vmem:[#allocation8 + $0x68] sm:$0xff]
    %v1133 = vld [vmem:[#allocation8 + $0x70] sm:$0xff]
    %v1134 = vld [vmem:[#allocation8 + $0x78] sm:$0xff]
    %v1135 = vld [vmem:[#allocation8 + $0x80] sm:$0xff]
    %v1136 = vld [vmem:[#allocation8 + $0x88] sm:$0xff]
    %v1137 = vld [vmem:[#allocation8 + $0x90] sm:$0xff]
    %v1138 = vld [vmem:[#allocation8 + $0x98] sm:$0xff]
    %v1139 = vld [vmem:[#allocation8 + $0xa0] sm:$0xff]
    %v1140 = vld [vmem:[#allocation8 + $0xa8] sm:$0xff]
    %v1141 = vld [vmem:[#allocation8 + $0xb0] sm:$0xff]
    %v1142 = vld [vmem:[#allocation8 + $0xb8] sm:$0xff]
    %v1143 = vld [vmem:[#allocation8 + $0xc0] sm:$0xff]
    %v1144 = vld [vmem:[#allocation8 + $0xc8] sm:$0xff]
    %v1145 = vld [vmem:[#allocation8 + $0xd0] sm:$0xff]
    %v1146 = vld [vmem:[#allocation8 + $0xd8] sm:$0xff]
    %v1147 = vld [vmem:[#allocation8 + $0xe0] sm:$0xff]
    %v1148 = vld [vmem:[#allocation8 + $0xe8] sm:$0xff]
    %v1149 = vld [vmem:[#allocation8 + $0xf0] sm:$0xff]
    %v1150 = vld [vmem:[#allocation8 + $0xf8] sm:$0xff]
    %v1151 = vld [vmem:[#allocation8 + $0x100] sm:$0xff]
    %v1152 = vld [vmem:[#allocation8 + $0x108] sm:$0xff]
    %v1153 = vld [vmem:[#allocation8 + $0x110] sm:$0xff]
    %v1154 = vld [vmem:[#allocation8 + $0x118] sm:$0xff]
    %v1155 = vld [vmem:[#allocation8 + $0x120] sm:$0xff]
    %v1156 = vld [vmem:[#allocation8 + $0x128] sm:$0xff]
    %v1157 = vld [vmem:[#allocation8 + $0x130] sm:$0xff]
    %v1158 = vld [vmem:[#allocation8 + $0x138] sm:$0xff]
    %v1159 = vld [vmem:[#allocation8 + $0x140] sm:$0xff]
    %v1160 = vld [vmem:[#allocation8 + $0x148] sm:$0xff]
    %v1161 = vld [vmem:[#allocation8 + $0x150] sm:$0xff]
    %v1162 = vld [vmem:[#allocation8 + $0x158] sm:$0xff]
    %v1163 = vld [vmem:[#allocation8 + $0x160] sm:$0xff]
    %v1164 = vld [vmem:[#allocation8 + $0x168] sm:$0xff]
    %v1165 = vld [vmem:[#allocation8 + $0x170] sm:$0xff]
    %v1166 = vld [vmem:[#allocation8 + $0x178] sm:$0xff]
    %v1167 = vld [vmem:[#allocation8 + $0x180] sm:$0xff]
    %v1168 = vld [vmem:[#allocation8 + $0x188] sm:$0xff]
    %v1169 = vld [vmem:[#allocation8 + $0x190] sm:$0xff]
    %v1170 = vld [vmem:[#allocation8 + $0x198] sm:$0xff]
    %v1171 = vld [vmem:[#allocation8 + $0x1a0] sm:$0xff]
    %v1172 = vld [vmem:[#allocation8 + $0x1a8] sm:$0xff]
    %v1173 = vld [vmem:[#allocation8 + $0x1b0] sm:$0xff]
    %v1174 = vld [vmem:[#allocation8 + $0x1b8] sm:$0xff]
    %v1175 = vld [vmem:[#allocation8 + $0x1c0] sm:$0xff]
    %v1176 = vld [vmem:[#allocation8 + $0x1c8] sm:$0xff]
    %v1177 = vld [vmem:[#allocation8 + $0x1d0] sm:$0xff]
    %v1178 = vld [vmem:[#allocation8 + $0x1d8] sm:$0xff]
    %v1179 = vld [vmem:[#allocation8 + $0x1e0] sm:$0xff]
    %v1180 = vld [vmem:[#allocation8 + $0x1e8] sm:$0xff]
    %v1181 = vld [vmem:[#allocation8 + $0x1f0] sm:$0xff]
    %v1182 = vld [vmem:[#allocation8 + $0x1f8] sm:$0xff]
    %v1183 = vld [vmem:[#allocation8 + $0x200] sm:$0xff]
    %v1184 = vld [vmem:[#allocation8 + $0x208] sm:$0xff]
    %v1185 = vld [vmem:[#allocation8 + $0x210] sm:$0xff]
    %v1186 = vld [vmem:[#allocation8 + $0x218] sm:$0xff]
    %v1187 = vld [vmem:[#allocation8 + $0x220] sm:$0xff]
    %v1188 = vld [vmem:[#allocation8 + $0x228] sm:$0xff]
    %v1189 = vld [vmem:[#allocation8 + $0x230] sm:$0xff]
    %v1190 = vld [vmem:[#allocation8 + $0x238] sm:$0xff]
    %v1191 = vld [vmem:[#allocation8 + $0x240] sm:$0xff]
    %v1192 = vld [vmem:[#allocation8 + $0x248] sm:$0xff]
    %v1193 = vld [vmem:[#allocation8 + $0x250] sm:$0xff]
    %v1194 = vld [vmem:[#allocation8 + $0x258] sm:$0xff]
    %v1195 = vld [vmem:[#allocation8 + $0x260] sm:$0xff]
    %v1196 = vld [vmem:[#allocation8 + $0x268] sm:$0xff]
    %v1197 = vld [vmem:[#allocation8 + $0x270] sm:$0xff]
    %v1198 = vld [vmem:[#allocation8 + $0x278] sm:$0xff]
    %v1199 = vld [vmem:[#allocation8 + $0x280] sm:$0xff]
    %v1200 = vld [vmem:[#allocation8 + $0x288] sm:$0xff]
    %v1201 = vld [vmem:[#allocation8 + $0x290] sm:$0xff]
    %v1202 = vld [vmem:[#allocation8 + $0x298] sm:$0xff]
    %v1203 = vld [vmem:[#allocation8 + $0x2a0] sm:$0xff]
    %v1204 = vld [vmem:[#allocation8 + $0x2a8] sm:$0xff]
    %v1205 = vld [vmem:[#allocation8 + $0x2b0] sm:$0xff]
    %v1206 = vld [vmem:[#allocation8 + $0x2b8] sm:$0xff]
    %v1207 = vld [vmem:[#allocation8 + $0x2c0] sm:$0xff]
    %v1208 = vld [vmem:[#allocation8 + $0x2c8] sm:$0xff]
    %v1209 = vld [vmem:[#allocation8 + $0x2d0] sm:$0xff]
    %v1210 = vld [vmem:[#allocation8 + $0x2d8] sm:$0xff]
    %v1211 = vld [vmem:[#allocation8 + $0x2e0] sm:$0xff]
    %v1212 = vld [vmem:[#allocation8 + $0x2e8] sm:$0xff]
    %v1213 = vld [vmem:[#allocation8 + $0x2f0] sm:$0xff]
    %v1214 = vld [vmem:[#allocation8 + $0x2f8] sm:$0xff]
    %v1215 = vld [vmem:[#allocation8 + $0x300] sm:$0xff]
    %v1216 = vld [vmem:[#allocation8 + $0x308] sm:$0xff]
    %v1217 = vld [vmem:[#allocation8 + $0x310] sm:$0xff]
    %v1218 = vld [vmem:[#allocation8 + $0x318] sm:$0xff]
    %v1219 = vld [vmem:[#allocation8 + $0x320] sm:$0xff]
    %v1220 = vld [vmem:[#allocation8 + $0x328] sm:$0xff]
    %v1221 = vld [vmem:[#allocation8 + $0x330] sm:$0xff]
    %v1222 = vld [vmem:[#allocation8 + $0x338] sm:$0xff]
    %v1223 = vld [vmem:[#allocation8 + $0x340] sm:$0xff]
    %v1224 = vld [vmem:[#allocation8 + $0x348] sm:$0xff]
    %v1225 = vld [vmem:[#allocation8 + $0x350] sm:$0xff]
    %v1226 = vld [vmem:[#allocation8 + $0x358] sm:$0xff]
    %v1227 = vld [vmem:[#allocation8 + $0x360] sm:$0xff]
    %v1228 = vld [vmem:[#allocation8 + $0x368] sm:$0xff]
    %v1229 = vld [vmem:[#allocation8 + $0x370] sm:$0xff]
    %v1230 = vld [vmem:[#allocation8 + $0x378] sm:$0xff]
    %v1231 = vld [vmem:[#allocation8 + $0x380] sm:$0xff]
    %v1232 = vld [vmem:[#allocation8 + $0x388] sm:$0xff]
    %v1233 = vld [vmem:[#allocation8 + $0x390] sm:$0xff]
    %v1234 = vld [vmem:[#allocation8 + $0x398] sm:$0xff]
    %v1235 = vld [vmem:[#allocation8 + $0x3a0] sm:$0xff]
    %v1236 = vld [vmem:[#allocation8 + $0x3a8] sm:$0xff]
    %v1237 = vld [vmem:[#allocation8 + $0x3b0] sm:$0xff]
    %v1238 = vld [vmem:[#allocation8 + $0x3b8] sm:$0xff]
    %v1239 = vld [vmem:[#allocation8 + $0x3c0] sm:$0xff]
    %v1240 = vld [vmem:[#allocation8 + $0x3c8] sm:$0xff]
    %v1241 = vld [vmem:[#allocation8 + $0x3d0] sm:$0xff]
    %v1242 = vld [vmem:[#allocation8 + $0x3d8] sm:$0xff]
    %v1243 = vld [vmem:[#allocation8 + $0x3e0] sm:$0xff]
    %v1244 = vld [vmem:[#allocation8 + $0x3e8] sm:$0xff]
    %v1245 = vld [vmem:[#allocation8 + $0x3f0] sm:$0xff]
    %v1246 = vld [vmem:[#allocation8 + $0x3f8] sm:$0xff]
    %v1247 = vld [vmem:[%s4] sm:$0x3]
    %v1249 = vperm.slane %v1247, 0
    %v1250 = vperm.slane %v1247, 1
    %v1381 = vunpack.c.l.b16 %v1119
    %v1382 = vunpack.c.h.b16 %v1119
    %v1383 = vunpack.c.l.b16 %v1120
    %v1384 = vunpack.c.h.b16 %v1120
    %v1385 = vunpack.c.l.b16 %v1121
    %v1386 = vunpack.c.h.b16 %v1121
    %v1387 = vunpack.c.l.b16 %v1122
    %v1388 = vunpack.c.h.b16 %v1122
    %v1389 = vunpack.c.l.b16 %v1123
    %v1390 = vunpack.c.h.b16 %v1123
    %v1391 = vunpack.c.l.b16 %v1124
    %v1392 = vunpack.c.h.b16 %v1124
    %v1393 = vunpack.c.l.b16 %v1125
    %v1394 = vunpack.c.h.b16 %v1125
    %v1395 = vunpack.c.l.b16 %v1126
    %v1396 = vunpack.c.h.b16 %v1126
    %v1397 = vunpack.c.l.b16 %v1127
    %v1398 = vunpack.c.h.b16 %v1127
    %v1399 = vunpack.c.l.b16 %v1128
    %v1400 = vunpack.c.h.b16 %v1128
    %v1401 = vunpack.c.l.b16 %v1129
    %v1402 = vunpack.c.h.b16 %v1129
    %v1403 = vunpack.c.l.b16 %v1130
    %v1404 = vunpack.c.h.b16 %v1130
    %v1405 = vunpack.c.l.b16 %v1131
    %v1406 = vunpack.c.h.b16 %v1131
    %v1407 = vunpack.c.l.b16 %v1132
    %v1408 = vunpack.c.h.b16 %v1132
    %v1409 = vunpack.c.l.b16 %v1133
    %v1410 = vunpack.c.h.b16 %v1133
    %v1411 = vunpack.c.l.b16 %v1134
    %v1412 = vunpack.c.h.b16 %v1134
    %v1413 = vunpack.c.l.b16 %v1135
    %v1414 = vunpack.c.h.b16 %v1135
    %v1415 = vunpack.c.l.b16 %v1136
    %v1416 = vunpack.c.h.b16 %v1136
    %v1417 = vunpack.c.l.b16 %v1137
    %v1418 = vunpack.c.h.b16 %v1137
    %v1419 = vunpack.c.l.b16 %v1138
    %v1420 = vunpack.c.h.b16 %v1138
    %v1421 = vunpack.c.l.b16 %v1139
    %v1422 = vunpack.c.h.b16 %v1139
    %v1423 = vunpack.c.l.b16 %v1140
    %v1424 = vunpack.c.h.b16 %v1140
    %v1425 = vunpack.c.l.b16 %v1141
    %v1426 = vunpack.c.h.b16 %v1141
    %v1427 = vunpack.c.l.b16 %v1142
    %v1428 = vunpack.c.h.b16 %v1142
    %v1429 = vunpack.c.l.b16 %v1143
    %v1430 = vunpack.c.h.b16 %v1143
    %v1431 = vunpack.c.l.b16 %v1144
    %v1432 = vunpack.c.h.b16 %v1144
    %v1433 = vunpack.c.l.b16 %v1145
    %v1434 = vunpack.c.h.b16 %v1145
    %v1435 = vunpack.c.l.b16 %v1146
    %v1436 = vunpack.c.h.b16 %v1146
    %v1437 = vunpack.c.l.b16 %v1147
    %v1438 = vunpack.c.h.b16 %v1147
    %v1439 = vunpack.c.l.b16 %v1148
    %v1440 = vunpack.c.h.b16 %v1148
    %v1441 = vunpack.c.l.b16 %v1149
    %v1442 = vunpack.c.h.b16 %v1149
    %v1443 = vunpack.c.l.b16 %v1150
    %v1444 = vunpack.c.h.b16 %v1150
    %v1445 = vunpack.c.l.b16 %v1151
    %v1446 = vunpack.c.h.b16 %v1151
    %v1447 = vunpack.c.l.b16 %v1152
    %v1448 = vunpack.c.h.b16 %v1152
    %v1449 = vunpack.c.l.b16 %v1153
    %v1450 = vunpack.c.h.b16 %v1153
    %v1451 = vunpack.c.l.b16 %v1154
    %v1452 = vunpack.c.h.b16 %v1154
    %v1453 = vunpack.c.l.b16 %v1155
    %v1454 = vunpack.c.h.b16 %v1155
    %v1455 = vunpack.c.l.b16 %v1156
    %v1456 = vunpack.c.h.b16 %v1156
    %v1457 = vunpack.c.l.b16 %v1157
    %v1458 = vunpack.c.h.b16 %v1157
    %v1459 = vunpack.c.l.b16 %v1158
    %v1460 = vunpack.c.h.b16 %v1158
    %v1461 = vunpack.c.l.b16 %v1159
    %v1462 = vunpack.c.h.b16 %v1159
    %v1463 = vunpack.c.l.b16 %v1160
    %v1464 = vunpack.c.h.b16 %v1160
    %v1465 = vunpack.c.l.b16 %v1161
    %v1466 = vunpack.c.h.b16 %v1161
    %v1467 = vunpack.c.l.b16 %v1162
    %v1468 = vunpack.c.h.b16 %v1162
    %v1469 = vunpack.c.l.b16 %v1163
    %v1470 = vunpack.c.h.b16 %v1163
    %v1471 = vunpack.c.l.b16 %v1164
    %v1472 = vunpack.c.h.b16 %v1164
    %v1473 = vunpack.c.l.b16 %v1165
    %v1474 = vunpack.c.h.b16 %v1165
    %v1475 = vunpack.c.l.b16 %v1166
    %v1476 = vunpack.c.h.b16 %v1166
    %v1477 = vunpack.c.l.b16 %v1167
    %v1478 = vunpack.c.h.b16 %v1167
    %v1479 = vunpack.c.l.b16 %v1168
    %v1480 = vunpack.c.h.b16 %v1168
    %v1481 = vunpack.c.l.b16 %v1169
    %v1482 = vunpack.c.h.b16 %v1169
    %v1483 = vunpack.c.l.b16 %v1170
    %v1484 = vunpack.c.h.b16 %v1170
    %v1485 = vunpack.c.l.b16 %v1171
    %v1486 = vunpack.c.h.b16 %v1171
    %v1487 = vunpack.c.l.b16 %v1172
    %v1488 = vunpack.c.h.b16 %v1172
    %v1489 = vunpack.c.l.b16 %v1173
    %v1490 = vunpack.c.h.b16 %v1173
    %v1491 = vunpack.c.l.b16 %v1174
    %v1492 = vunpack.c.h.b16 %v1174
    %v1493 = vunpack.c.l.b16 %v1175
    %v1494 = vunpack.c.h.b16 %v1175
    %v1495 = vunpack.c.l.b16 %v1176
    %v1496 = vunpack.c.h.b16 %v1176
    %v1497 = vunpack.c.l.b16 %v1177
    %v1498 = vunpack.c.h.b16 %v1177
    %v1499 = vunpack.c.l.b16 %v1178
    %v1500 = vunpack.c.h.b16 %v1178
    %v1501 = vunpack.c.l.b16 %v1179
    %v1502 = vunpack.c.h.b16 %v1179
    %v1503 = vunpack.c.l.b16 %v1180
    %v1504 = vunpack.c.h.b16 %v1180
    %v1505 = vunpack.c.l.b16 %v1181
    %v1506 = vunpack.c.h.b16 %v1181
    %v1507 = vunpack.c.l.b16 %v1182
    %v1508 = vunpack.c.h.b16 %v1182
    %v1509 = vunpack.c.l.b16 %v1183
    %v1510 = vunpack.c.h.b16 %v1183
    %v1511 = vunpack.c.l.b16 %v1184
    %v1512 = vunpack.c.h.b16 %v1184
    %v1513 = vunpack.c.l.b16 %v1185
    %v1514 = vunpack.c.h.b16 %v1185
    %v1515 = vunpack.c.l.b16 %v1186
    %v1516 = vunpack.c.h.b16 %v1186
    %v1517 = vunpack.c.l.b16 %v1187
    %v1518 = vunpack.c.h.b16 %v1187
    %v1519 = vunpack.c.l.b16 %v1188
    %v1520 = vunpack.c.h.b16 %v1188
    %v1521 = vunpack.c.l.b16 %v1189
    %v1522 = vunpack.c.h.b16 %v1189
    %v1523 = vunpack.c.l.b16 %v1190
    %v1524 = vunpack.c.h.b16 %v1190
    %v1525 = vunpack.c.l.b16 %v1191
    %v1526 = vunpack.c.h.b16 %v1191
    %v1527 = vunpack.c.l.b16 %v1192
    %v1528 = vunpack.c.h.b16 %v1192
    %v1529 = vunpack.c.l.b16 %v1193
    %v1530 = vunpack.c.h.b16 %v1193
    %v1531 = vunpack.c.l.b16 %v1194
    %v1532 = vunpack.c.h.b16 %v1194
    %v1533 = vunpack.c.l.b16 %v1195
    %v1534 = vunpack.c.h.b16 %v1195
    %v1535 = vunpack.c.l.b16 %v1196
    %v1536 = vunpack.c.h.b16 %v1196
    %v1537 = vunpack.c.l.b16 %v1197
    %v1538 = vunpack.c.h.b16 %v1197
    %v1539 = vunpack.c.l.b16 %v1198
    %v1540 = vunpack.c.h.b16 %v1198
    %v1541 = vunpack.c.l.b16 %v1199
    %v1542 = vunpack.c.h.b16 %v1199
    %v1543 = vunpack.c.l.b16 %v1200
    %v1544 = vunpack.c.h.b16 %v1200
    %v1545 = vunpack.c.l.b16 %v1201
    %v1546 = vunpack.c.h.b16 %v1201
    %v1547 = vunpack.c.l.b16 %v1202
    %v1548 = vunpack.c.h.b16 %v1202
    %v1549 = vunpack.c.l.b16 %v1203
    %v1550 = vunpack.c.h.b16 %v1203
    %v1551 = vunpack.c.l.b16 %v1204
    %v1552 = vunpack.c.h.b16 %v1204
    %v1553 = vunpack.c.l.b16 %v1205
    %v1554 = vunpack.c.h.b16 %v1205
    %v1555 = vunpack.c.l.b16 %v1206
    %v1556 = vunpack.c.h.b16 %v1206
    %v1557 = vunpack.c.l.b16 %v1207
    %v1558 = vunpack.c.h.b16 %v1207
    %v1559 = vunpack.c.l.b16 %v1208
    %v1560 = vunpack.c.h.b16 %v1208
    %v1561 = vunpack.c.l.b16 %v1209
    %v1562 = vunpack.c.h.b16 %v1209
    %v1563 = vunpack.c.l.b16 %v1210
    %v1564 = vunpack.c.h.b16 %v1210
    %v1565 = vunpack.c.l.b16 %v1211
    %v1566 = vunpack.c.h.b16 %v1211
    %v1567 = vunpack.c.l.b16 %v1212
    %v1568 = vunpack.c.h.b16 %v1212
    %v1569 = vunpack.c.l.b16 %v1213
    %v1570 = vunpack.c.h.b16 %v1213
    %v1571 = vunpack.c.l.b16 %v1214
    %v1572 = vunpack.c.h.b16 %v1214
    %v1573 = vunpack.c.l.b16 %v1215
    %v1574 = vunpack.c.h.b16 %v1215
    %v1575 = vunpack.c.l.b16 %v1216
    %v1576 = vunpack.c.h.b16 %v1216
    %v1577 = vunpack.c.l.b16 %v1217
    %v1578 = vunpack.c.h.b16 %v1217
    %v1579 = vunpack.c.l.b16 %v1218
    %v1580 = vunpack.c.h.b16 %v1218
    %v1581 = vunpack.c.l.b16 %v1219
    %v1582 = vunpack.c.h.b16 %v1219
    %v1583 = vunpack.c.l.b16 %v1220
    %v1584 = vunpack.c.h.b16 %v1220
    %v1585 = vunpack.c.l.b16 %v1221
    %v1586 = vunpack.c.h.b16 %v1221
    %v1587 = vunpack.c.l.b16 %v1222
    %v1588 = vunpack.c.h.b16 %v1222
    %v1589 = vunpack.c.l.b16 %v1223
    %v1590 = vunpack.c.h.b16 %v1223
    %v1591 = vunpack.c.l.b16 %v1224
    %v1592 = vunpack.c.h.b16 %v1224
    %v1593 = vunpack.c.l.b16 %v1225
    %v1594 = vunpack.c.h.b16 %v1225
    %v1595 = vunpack.c.l.b16 %v1226
    %v1596 = vunpack.c.h.b16 %v1226
    %v1597 = vunpack.c.l.b16 %v1227
    %v1598 = vunpack.c.h.b16 %v1227
    %v1599 = vunpack.c.l.b16 %v1228
    %v1600 = vunpack.c.h.b16 %v1228
    %v1601 = vunpack.c.l.b16 %v1229
    %v1602 = vunpack.c.h.b16 %v1229
    %v1603 = vunpack.c.l.b16 %v1230
    %v1604 = vunpack.c.h.b16 %v1230
    %v1605 = vunpack.c.l.b16 %v1231
    %v1606 = vunpack.c.h.b16 %v1231
    %v1607 = vunpack.c.l.b16 %v1232
    %v1608 = vunpack.c.h.b16 %v1232
    %v1609 = vunpack.c.l.b16 %v1233
    %v1610 = vunpack.c.h.b16 %v1233
    %v1611 = vunpack.c.l.b16 %v1234
    %v1612 = vunpack.c.h.b16 %v1234
    %v1613 = vunpack.c.l.b16 %v1235
    %v1614 = vunpack.c.h.b16 %v1235
    %v1615 = vunpack.c.l.b16 %v1236
    %v1616 = vunpack.c.h.b16 %v1236
    %v1617 = vunpack.c.l.b16 %v1237
    %v1618 = vunpack.c.h.b16 %v1237
    %v1619 = vunpack.c.l.b16 %v1238
    %v1620 = vunpack.c.h.b16 %v1238
    %v1621 = vunpack.c.l.b16 %v1239
    %v1622 = vunpack.c.h.b16 %v1239
    %v1623 = vunpack.c.l.b16 %v1240
    %v1624 = vunpack.c.h.b16 %v1240
    %v1625 = vunpack.c.l.b16 %v1241
    %v1626 = vunpack.c.h.b16 %v1241
    %v1627 = vunpack.c.l.b16 %v1242
    %v1628 = vunpack.c.h.b16 %v1242
    %v1629 = vunpack.c.l.b16 %v1243
    %v1630 = vunpack.c.h.b16 %v1243
    %v1631 = vunpack.c.l.b16 %v1244
    %v1632 = vunpack.c.h.b16 %v1244
    %v1633 = vunpack.c.l.b16 %v1245
    %v1634 = vunpack.c.h.b16 %v1245
    %v1635 = vunpack.c.l.b16 %v1246
    %v1636 = vunpack.c.h.b16 %v1246
    %v1637 = vpack.c.b16 %v1383, %v1381
    %v1638 = vpack.c.b16 %v1384, %v1382
    %v1639 = vpack.c.b16 %v1387, %v1385
    %v1640 = vpack.c.b16 %v1388, %v1386
    %v1641 = vpack.c.b16 %v1391, %v1389
    %v1642 = vpack.c.b16 %v1392, %v1390
    %v1643 = vpack.c.b16 %v1395, %v1393
    %v1644 = vpack.c.b16 %v1396, %v1394
    %v1645 = vpack.c.b16 %v1399, %v1397
    %v1646 = vpack.c.b16 %v1400, %v1398
    %v1647 = vpack.c.b16 %v1403, %v1401
    %v1648 = vpack.c.b16 %v1404, %v1402
    %v1649 = vpack.c.b16 %v1407, %v1405
    %v1650 = vpack.c.b16 %v1408, %v1406
    %v1651 = vpack.c.b16 %v1411, %v1409
    %v1652 = vpack.c.b16 %v1412, %v1410
    %v1653 = vpack.c.b16 %v1415, %v1413
    %v1654 = vpack.c.b16 %v1416, %v1414
    %v1655 = vpack.c.b16 %v1419, %v1417
    %v1656 = vpack.c.b16 %v1420, %v1418
    %v1657 = vpack.c.b16 %v1423, %v1421
    %v1658 = vpack.c.b16 %v1424, %v1422
    %v1659 = vpack.c.b16 %v1427, %v1425
    %v1660 = vpack.c.b16 %v1428, %v1426
    %v1661 = vpack.c.b16 %v1431, %v1429
    %v1662 = vpack.c.b16 %v1432, %v1430
    %v1663 = vpack.c.b16 %v1435, %v1433
    %v1664 = vpack.c.b16 %v1436, %v1434
    %v1665 = vpack.c.b16 %v1439, %v1437
    %v1666 = vpack.c.b16 %v1440, %v1438
    %v1667 = vpack.c.b16 %v1443, %v1441
    %v1668 = vpack.c.b16 %v1444, %v1442
    %v1669 = vpack.c.b16 %v1447, %v1445
    %v1670 = vpack.c.b16 %v1448, %v1446
    %v1671 = vpack.c.b16 %v1451, %v1449
    %v1672 = vpack.c.b16 %v1452, %v1450
    %v1673 = vpack.c.b16 %v1455, %v1453
    %v1674 = vpack.c.b16 %v1456, %v1454
    %v1675 = vpack.c.b16 %v1459, %v1457
    %v1676 = vpack.c.b16 %v1460, %v1458
    %v1677 = vpack.c.b16 %v1463, %v1461
    %v1678 = vpack.c.b16 %v1464, %v1462
    %v1679 = vpack.c.b16 %v1467, %v1465
    %v1680 = vpack.c.b16 %v1468, %v1466
    %v1681 = vpack.c.b16 %v1471, %v1469
    %v1682 = vpack.c.b16 %v1472, %v1470
    %v1683 = vpack.c.b16 %v1475, %v1473
    %v1684 = vpack.c.b16 %v1476, %v1474
    %v1685 = vpack.c.b16 %v1479, %v1477
    %v1686 = vpack.c.b16 %v1480, %v1478
    %v1687 = vpack.c.b16 %v1483, %v1481
    %v1688 = vpack.c.b16 %v1484, %v1482
    %v1689 = vpack.c.b16 %v1487, %v1485
    %v1690 = vpack.c.b16 %v1488, %v1486
    %v1691 = vpack.c.b16 %v1491, %v1489
    %v1692 = vpack.c.b16 %v1492, %v1490
    %v1693 = vpack.c.b16 %v1495, %v1493
    %v1694 = vpack.c.b16 %v1496, %v1494
    %v1695 = vpack.c.b16 %v1499, %v1497
    %v1696 = vpack.c.b16 %v1500, %v1498
    %v1697 = vpack.c.b16 %v1503, %v1501
    %v1698 = vpack.c.b16 %v1504, %v1502
    %v1699 = vpack.c.b16 %v1507, %v1505
    %v1700 = vpack.c.b16 %v1508, %v1506
    %v1701 = vpack.c.b16 %v1511, %v1509
    %v1702 = vpack.c.b16 %v1512, %v1510
    %v1703 = vpack.c.b16 %v1515, %v1513
    %v1704 = vpack.c.b16 %v1516, %v1514
    %v1705 = vpack.c.b16 %v1519, %v1517
    %v1706 = vpack.c.b16 %v1520, %v1518
    %v1707 = vpack.c.b16 %v1523, %v1521
    %v1708 = vpack.c.b16 %v1524, %v1522
    %v1709 = vpack.c.b16 %v1527, %v1525
    %v1710 = vpack.c.b16 %v1528, %v1526
    %v1711 = vpack.c.b16 %v1531, %v1529
    %v1712 = vpack.c.b16 %v1532, %v1530
    %v1713 = vpack.c.b16 %v1535, %v1533
    %v1714 = vpack.c.b16 %v1536, %v1534
    %v1715 = vpack.c.b16 %v1539, %v1537
    %v1716 = vpack.c.b16 %v1540, %v1538
    %v1717 = vpack.c.b16 %v1543, %v1541
    %v1718 = vpack.c.b16 %v1544, %v1542
    %v1719 = vpack.c.b16 %v1547, %v1545
    %v1720 = vpack.c.b16 %v1548, %v1546
    %v1721 = vpack.c.b16 %v1551, %v1549
    %v1722 = vpack.c.b16 %v1552, %v1550
    %v1723 = vpack.c.b16 %v1555, %v1553
    %v1724 = vpack.c.b16 %v1556, %v1554
    %v1725 = vpack.c.b16 %v1559, %v1557
    %v1726 = vpack.c.b16 %v1560, %v1558
    %v1727 = vpack.c.b16 %v1563, %v1561
    %v1728 = vpack.c.b16 %v1564, %v1562
    %v1729 = vpack.c.b16 %v1567, %v1565
    %v1730 = vpack.c.b16 %v1568, %v1566
    %v1731 = vpack.c.b16 %v1571, %v1569
    %v1732 = vpack.c.b16 %v1572, %v1570
    %v1733 = vpack.c.b16 %v1575, %v1573
    %v1734 = vpack.c.b16 %v1576, %v1574
    %v1735 = vpack.c.b16 %v1579, %v1577
    %v1736 = vpack.c.b16 %v1580, %v1578
    %v1737 = vpack.c.b16 %v1583, %v1581
    %v1738 = vpack.c.b16 %v1584, %v1582
    %v1739 = vpack.c.b16 %v1587, %v1585
    %v1740 = vpack.c.b16 %v1588, %v1586
    %v1741 = vpack.c.b16 %v1591, %v1589
    %v1742 = vpack.c.b16 %v1592, %v1590
    %v1743 = vpack.c.b16 %v1595, %v1593
    %v1744 = vpack.c.b16 %v1596, %v1594
    %v1745 = vpack.c.b16 %v1599, %v1597
    %v1746 = vpack.c.b16 %v1600, %v1598
    %v1747 = vpack.c.b16 %v1603, %v1601
    %v1748 = vpack.c.b16 %v1604, %v1602
    %v1749 = vpack.c.b16 %v1607, %v1605
    %v1750 = vpack.c.b16 %v1608, %v1606
    %v1751 = vpack.c.b16 %v1611, %v1609
    %v1752 = vpack.c.b16 %v1612, %v1610
    %v1753 = vpack.c.b16 %v1615, %v1613
    %v1754 = vpack.c.b16 %v1616, %v1614
    %v1755 = vpack.c.b16 %v1619, %v1617
    %v1756 = vpack.c.b16 %v1620, %v1618
    %v1757 = vpack.c.b16 %v1623, %v1621
    %v1758 = vpack.c.b16 %v1624, %v1622
    %v1759 = vpack.c.b16 %v1627, %v1625
    %v1760 = vpack.c.b16 %v1628, %v1626
    %v1761 = vpack.c.b16 %v1631, %v1629
    %v1762 = vpack.c.b16 %v1632, %v1630
    %v1763 = vpack.c.b16 %v1635, %v1633
    %v1764 = vpack.c.b16 %v1636, %v1634
    %1893 = vmatpush.bf16.msra.mxu0 %v1651
    %1894 = vmatpush.bf16.msra.mxu0 %v1649
    %1895 = vmatpush.bf16.msra.mxu0 %v1647
    %1896 = vmatpush.bf16.msra.mxu0 %v1645
    %1897 = vmatpush.bf16.msra.mxu0 %v1643
    %1898 = vmatpush.bf16.msra.mxu0 %v1641
    %1899 = vmatpush.bf16.msra.mxu0 %v1639
    %1900 = vmatpush.bf16.msra.mxu0 %v1637
    %1901 = vmatmul.bf16.gmra.mxu0 %v1111
    %v1902 = vpop.f32.mrf.mxu0
    %v1903 = vadd.f32 %v1249, %v1902
    %v1904 = vpop.f32.mrf.mxu0
    %1905 = vdwg.mxu0
    %1906 = vmatpush.bf16.msra.mxu0 %v1667
    %1907 = vmatpush.bf16.msra.mxu0 %v1665
    %1908 = vmatpush.bf16.msra.mxu0 %v1663
    %1909 = vmatpush.bf16.msra.mxu0 %v1661
    %1910 = vmatpush.bf16.msra.mxu0 %v1659
    %1911 = vmatpush.bf16.msra.mxu0 %v1657
    %1912 = vmatpush.bf16.msra.mxu0 %v1655
    %1913 = vmatpush.bf16.msra.mxu0 %v1653
    %1914 = vmatmul.bf16.gmra.mxu0 %v1112
    %v1915 = vpop.f32.mrf.mxu0
    %v1916 = vadd.f32 %v1903, %v1915
    %v1917 = vpop.f32.mrf.mxu0
    %1918 = vdwg.mxu0
    %1919 = vmatpush.bf16.msra.mxu0 %v1683
    %1920 = vmatpush.bf16.msra.mxu0 %v1681
    %1921 = vmatpush.bf16.msra.mxu0 %v1679
    %1922 = vmatpush.bf16.msra.mxu0 %v1677
    %1923 = vmatpush.bf16.msra.mxu0 %v1675
    %1924 = vmatpush.bf16.msra.mxu0 %v1673
    %1925 = vmatpush.bf16.msra.mxu0 %v1671
    %1926 = vmatpush.bf16.msra.mxu0 %v1669
    %1927 = vmatmul.bf16.gmra.mxu0 %v1113
    %v1928 = vpop.f32.mrf.mxu0
    %v1929 = vadd.f32 %v1916, %v1928
    %v1930 = vpop.f32.mrf.mxu0
    %1931 = vdwg.mxu0
    %1932 = vmatpush.bf16.msra.mxu0 %v1699
    %1933 = vmatpush.bf16.msra.mxu0 %v1697
    %1934 = vmatpush.bf16.msra.mxu0 %v1695
    %1935 = vmatpush.bf16.msra.mxu0 %v1693
    %1936 = vmatpush.bf16.msra.mxu0 %v1691
    %1937 = vmatpush.bf16.msra.mxu0 %v1689
    %1938 = vmatpush.bf16.msra.mxu0 %v1687
    %1939 = vmatpush.bf16.msra.mxu0 %v1685
    %1940 = vmatmul.bf16.gmra.mxu0 %v1114
    %v1941 = vpop.f32.mrf.mxu0
    %v1942 = vadd.f32 %v1929, %v1941
    %v1943 = vpop.f32.mrf.mxu0
    %1944 = vdwg.mxu0
    %1945 = vmatpush.bf16.msra.mxu0 %v1715
    %1946 = vmatpush.bf16.msra.mxu0 %v1713
    %1947 = vmatpush.bf16.msra.mxu0 %v1711
    %1948 = vmatpush.bf16.msra.mxu0 %v1709
    %1949 = vmatpush.bf16.msra.mxu0 %v1707
    %1950 = vmatpush.bf16.msra.mxu0 %v1705
    %1951 = vmatpush.bf16.msra.mxu0 %v1703
    %1952 = vmatpush.bf16.msra.mxu0 %v1701
    %1953 = vmatmul.bf16.gmra.mxu0 %v1115
    %v1954 = vpop.f32.mrf.mxu0
    %v1955 = vadd.f32 %v1942, %v1954
    %v1956 = vpop.f32.mrf.mxu0
    %1957 = vdwg.mxu0
    %1958 = vmatpush.bf16.msra.mxu0 %v1731
    %1959 = vmatpush.bf16.msra.mxu0 %v1729
    %1960 = vmatpush.bf16.msra.mxu0 %v1727
    %1961 = vmatpush.bf16.msra.mxu0 %v1725
    %1962 = vmatpush.bf16.msra.mxu0 %v1723
    %1963 = vmatpush.bf16.msra.mxu0 %v1721
    %1964 = vmatpush.bf16.msra.mxu0 %v1719
    %1965 = vmatpush.bf16.msra.mxu0 %v1717
    %1966 = vmatmul.bf16.gmra.mxu0 %v1116
    %v1967 = vpop.f32.mrf.mxu0
    %v1968 = vadd.f32 %v1955, %v1967
    %v1969 = vpop.f32.mrf.mxu0
    %1970 = vdwg.mxu0
    %1971 = vmatpush.bf16.msra.mxu0 %v1747
    %1972 = vmatpush.bf16.msra.mxu0 %v1745
    %1973 = vmatpush.bf16.msra.mxu0 %v1743
    %1974 = vmatpush.bf16.msra.mxu0 %v1741
    %1975 = vmatpush.bf16.msra.mxu0 %v1739
    %1976 = vmatpush.bf16.msra.mxu0 %v1737
    %1977 = vmatpush.bf16.msra.mxu0 %v1735
    %1978 = vmatpush.bf16.msra.mxu0 %v1733
    %1979 = vmatmul.bf16.gmra.mxu0 %v1117
    %v1980 = vpop.f32.mrf.mxu0
    %v1981 = vadd.f32 %v1968, %v1980
    %v1982 = vpop.f32.mrf.mxu0
    %1983 = vdwg.mxu0
    %1984 = vmatpush.bf16.msra.mxu0 %v1763
    %1985 = vmatpush.bf16.msra.mxu0 %v1761
    %1986 = vmatpush.bf16.msra.mxu0 %v1759
    %1987 = vmatpush.bf16.msra.mxu0 %v1757
    %1988 = vmatpush.bf16.msra.mxu0 %v1755
    %1989 = vmatpush.bf16.msra.mxu0 %v1753
    %1990 = vmatpush.bf16.msra.mxu0 %v1751
    %1991 = vmatpush.bf16.msra.mxu0 %v1749
    %1992 = vmatmul.bf16.gmra.mxu0 %v1118
    %v1993 = vpop.f32.mrf.mxu0
    %v1994 = vadd.f32 %v1981, %v1993
    %v1995 = vpop.f32.mrf.mxu0
    %1996 = vdwg.mxu0
    %1997 = vmatpush.bf16.msra.mxu0 %v1652
    %1998 = vmatpush.bf16.msra.mxu0 %v1650
    %1999 = vmatpush.bf16.msra.mxu0 %v1648
    %2000 = vmatpush.bf16.msra.mxu0 %v1646
    %2001 = vmatpush.bf16.msra.mxu0 %v1644
    %2002 = vmatpush.bf16.msra.mxu0 %v1642
    %2003 = vmatpush.bf16.msra.mxu0 %v1640
    %2004 = vmatpush.bf16.msra.mxu0 %v1638
    %2005 = vmatmul.bf16.gmra.mxu0 %v1111
    %v2006 = vpop.f32.mrf.mxu0
    %v2007 = vadd.f32 %v1250, %v2006
    %v2008 = vpop.f32.mrf.mxu0
    %2009 = vdwg.mxu0
    %2010 = vmatpush.bf16.msra.mxu0 %v1668
    %2011 = vmatpush.bf16.msra.mxu0 %v1666
    %2012 = vmatpush.bf16.msra.mxu0 %v1664
    %2013 = vmatpush.bf16.msra.mxu0 %v1662
    %2014 = vmatpush.bf16.msra.mxu0 %v1660
    %2015 = vmatpush.bf16.msra.mxu0 %v1658
    %2016 = vmatpush.bf16.msra.mxu0 %v1656
    %2017 = vmatpush.bf16.msra.mxu0 %v1654
    %2018 = vmatmul.bf16.gmra.mxu0 %v1112
    %v2019 = vpop.f32.mrf.mxu0
    %v2020 = vadd.f32 %v2007, %v2019
    %v2021 = vpop.f32.mrf.mxu0
    %2022 = vdwg.mxu0
    %2023 = vmatpush.bf16.msra.mxu0 %v1684
    %2024 = vmatpush.bf16.msra.mxu0 %v1682
    %2025 = vmatpush.bf16.msra.mxu0 %v1680
    %2026 = vmatpush.bf16.msra.mxu0 %v1678
    %2027 = vmatpush.bf16.msra.mxu0 %v1676
    %2028 = vmatpush.bf16.msra.mxu0 %v1674
    %2029 = vmatpush.bf16.msra.mxu0 %v1672
    %2030 = vmatpush.bf16.msra.mxu0 %v1670
    %2031 = vmatmul.bf16.gmra.mxu0 %v1113
    %v2032 = vpop.f32.mrf.mxu0
    %v2033 = vadd.f32 %v2020, %v2032
    %v2034 = vpop.f32.mrf.mxu0
    %2035 = vdwg.mxu0
    %2036 = vmatpush.bf16.msra.mxu0 %v1700
    %2037 = vmatpush.bf16.msra.mxu0 %v1698
    %2038 = vmatpush.bf16.msra.mxu0 %v1696
    %2039 = vmatpush.bf16.msra.mxu0 %v1694
    %2040 = vmatpush.bf16.msra.mxu0 %v1692
    %2041 = vmatpush.bf16.msra.mxu0 %v1690
    %2042 = vmatpush.bf16.msra.mxu0 %v1688
    %2043 = vmatpush.bf16.msra.mxu0 %v1686
    %2044 = vmatmul.bf16.gmra.mxu0 %v1114
    %v2045 = vpop.f32.mrf.mxu0
    %v2046 = vadd.f32 %v2033, %v2045
    %v2047 = vpop.f32.mrf.mxu0
    %2048 = vdwg.mxu0
    %2049 = vmatpush.bf16.msra.mxu0 %v1716
    %2050 = vmatpush.bf16.msra.mxu0 %v1714
    %2051 = vmatpush.bf16.msra.mxu0 %v1712
    %2052 = vmatpush.bf16.msra.mxu0 %v1710
    %2053 = vmatpush.bf16.msra.mxu0 %v1708
    %2054 = vmatpush.bf16.msra.mxu0 %v1706
    %2055 = vmatpush.bf16.msra.mxu0 %v1704
    %2056 = vmatpush.bf16.msra.mxu0 %v1702
    %2057 = vmatmul.bf16.gmra.mxu0 %v1115
    %v2058 = vpop.f32.mrf.mxu0
    %v2059 = vadd.f32 %v2046, %v2058
    %v2060 = vpop.f32.mrf.mxu0
    %2061 = vdwg.mxu0
    %2062 = vmatpush.bf16.msra.mxu0 %v1732
    %2063 = vmatpush.bf16.msra.mxu0 %v1730
    %2064 = vmatpush.bf16.msra.mxu0 %v1728
    %2065 = vmatpush.bf16.msra.mxu0 %v1726
    %2066 = vmatpush.bf16.msra.mxu0 %v1724
    %2067 = vmatpush.bf16.msra.mxu0 %v1722
    %2068 = vmatpush.bf16.msra.mxu0 %v1720
    %2069 = vmatpush.bf16.msra.mxu0 %v1718
    %2070 = vmatmul.bf16.gmra.mxu0 %v1116
    %v2071 = vpop.f32.mrf.mxu0
    %v2072 = vadd.f32 %v2059, %v2071
    %v2073 = vpop.f32.mrf.mxu0
    %2074 = vdwg.mxu0
    %2075 = vmatpush.bf16.msra.mxu0 %v1748
    %2076 = vmatpush.bf16.msra.mxu0 %v1746
    %2077 = vmatpush.bf16.msra.mxu0 %v1744
    %2078 = vmatpush.bf16.msra.mxu0 %v1742
    %2079 = vmatpush.bf16.msra.mxu0 %v1740
    %2080 = vmatpush.bf16.msra.mxu0 %v1738
    %2081 = vmatpush.bf16.msra.mxu0 %v1736
    %2082 = vmatpush.bf16.msra.mxu0 %v1734
    %2083 = vmatmul.bf16.gmra.mxu0 %v1117
    %v2084 = vpop.f32.mrf.mxu0
    %v2085 = vadd.f32 %v2072, %v2084
    %v2086 = vpop.f32.mrf.mxu0
    %2087 = vdwg.mxu0
    %2088 = vmatpush.bf16.msra.mxu0 %v1764
    %2089 = vmatpush.bf16.msra.mxu0 %v1762
    %2090 = vmatpush.bf16.msra.mxu0 %v1760
    %2091 = vmatpush.bf16.msra.mxu0 %v1758
    %2092 = vmatpush.bf16.msra.mxu0 %v1756
    %2093 = vmatpush.bf16.msra.mxu0 %v1754
    %2094 = vmatpush.bf16.msra.mxu0 %v1752
    %2095 = vmatpush.bf16.msra.mxu0 %v1750
    %2096 = vmatmul.bf16.gmra.mxu0 %v1118
    %v2097 = vpop.f32.mrf.mxu0
    %v2098 = vadd.f32 %v2085, %v2097
    %v2099 = vpop.f32.mrf.mxu0
    %2100 = vdwg.mxu0
    %v2101 = vmax.f32 %v1994, 0.0
    %v2102 = vmax.f32 %v2098, 0.0
    %v2103 = vpack.c.bf16 %v2101, %v2101
    %v2104 = vpack.c.bf16 %v2102, %v2102
    %v2105 = vld [vmem:[#allocation10] sm:$0xf]
    %v2106 = vld [vmem:[#allocation10 + $0x4] sm:$0xf]
    %v2107 = vld [vmem:[#allocation10 + $0x8] sm:$0xf]
    %v2108 = vld [vmem:[#allocation10 + $0xc] sm:$0xf]
    %v2109 = vld [vmem:[#allocation10 + $0x10] sm:$0xf]
    %v2110 = vld [vmem:[#allocation10 + $0x14] sm:$0xf]
    %v2111 = vld [vmem:[#allocation10 + $0x18] sm:$0xf]
    %v2112 = vld [vmem:[#allocation10 + $0x1c] sm:$0xf]
    %v2113 = vld [vmem:[#allocation10 + $0x20] sm:$0xf]
    %v2114 = vld [vmem:[#allocation10 + $0x24] sm:$0xf]
    %v2115 = vld [vmem:[#allocation10 + $0x28] sm:$0xf]
    %v2116 = vld [vmem:[#allocation10 + $0x2c] sm:$0xf]
    %v2117 = vld [vmem:[#allocation10 + $0x30] sm:$0xf]
    %v2118 = vld [vmem:[#allocation10 + $0x34] sm:$0xf]
    %v2119 = vld [vmem:[#allocation10 + $0x38] sm:$0xf]
    %v2120 = vld [vmem:[#allocation10 + $0x3c] sm:$0xf]
    %v2121 = vld [vmem:[#allocation10 + $0x40] sm:$0xf]
    %v2122 = vld [vmem:[#allocation10 + $0x44] sm:$0xf]
    %v2123 = vld [vmem:[#allocation10 + $0x48] sm:$0xf]
    %v2124 = vld [vmem:[#allocation10 + $0x4c] sm:$0xf]
    %v2125 = vld [vmem:[#allocation10 + $0x50] sm:$0xf]
    %v2126 = vld [vmem:[#allocation10 + $0x54] sm:$0xf]
    %v2127 = vld [vmem:[#allocation10 + $0x58] sm:$0xf]
    %v2128 = vld [vmem:[#allocation10 + $0x5c] sm:$0xf]
    %v2129 = vld [vmem:[#allocation10 + $0x60] sm:$0xf]
    %v2130 = vld [vmem:[#allocation10 + $0x64] sm:$0xf]
    %v2131 = vld [vmem:[#allocation10 + $0x68] sm:$0xf]
    %v2132 = vld [vmem:[#allocation10 + $0x6c] sm:$0xf]
    %v2133 = vld [vmem:[#allocation10 + $0x70] sm:$0xf]
    %v2134 = vld [vmem:[#allocation10 + $0x74] sm:$0xf]
    %v2135 = vld [vmem:[#allocation10 + $0x78] sm:$0xf]
    %v2136 = vld [vmem:[#allocation10 + $0x7c] sm:$0xf]
    %v2137 = vld [vmem:[%s6] sm:$0x1]
    %v2139 = vperm.slane %v2137, 0
    %v2173 = vunpack.c.l.b16 %v2105
    %v2174 = vunpack.c.l.b16 %v2106
    %v2175 = vunpack.c.l.b16 %v2107
    %v2176 = vunpack.c.l.b16 %v2108
    %v2177 = vunpack.c.l.b16 %v2109
    %v2178 = vunpack.c.l.b16 %v2110
    %v2179 = vunpack.c.l.b16 %v2111
    %v2180 = vunpack.c.l.b16 %v2112
    %v2181 = vunpack.c.l.b16 %v2113
    %v2182 = vunpack.c.l.b16 %v2114
    %v2183 = vunpack.c.l.b16 %v2115
    %v2184 = vunpack.c.l.b16 %v2116
    %v2185 = vunpack.c.l.b16 %v2117
    %v2186 = vunpack.c.l.b16 %v2118
    %v2187 = vunpack.c.l.b16 %v2119
    %v2188 = vunpack.c.l.b16 %v2120
    %v2189 = vunpack.c.l.b16 %v2121
    %v2190 = vunpack.c.l.b16 %v2122
    %v2191 = vunpack.c.l.b16 %v2123
    %v2192 = vunpack.c.l.b16 %v2124
    %v2193 = vunpack.c.l.b16 %v2125
    %v2194 = vunpack.c.l.b16 %v2126
    %v2195 = vunpack.c.l.b16 %v2127
    %v2196 = vunpack.c.l.b16 %v2128
    %v2197 = vunpack.c.l.b16 %v2129
    %v2198 = vunpack.c.l.b16 %v2130
    %v2199 = vunpack.c.l.b16 %v2131
    %v2200 = vunpack.c.l.b16 %v2132
    %v2201 = vunpack.c.l.b16 %v2133
    %v2202 = vunpack.c.l.b16 %v2134
    %v2203 = vunpack.c.l.b16 %v2135
    %v2204 = vunpack.c.l.b16 %v2136
    %v2205 = vpack.c.b16 %v2174, %v2173
    %v2206 = vpack.c.b16 %v2176, %v2175
    %v2207 = vpack.c.b16 %v2178, %v2177
    %v2208 = vpack.c.b16 %v2180, %v2179
    %v2209 = vpack.c.b16 %v2182, %v2181
    %v2210 = vpack.c.b16 %v2184, %v2183
    %v2211 = vpack.c.b16 %v2186, %v2185
    %v2212 = vpack.c.b16 %v2188, %v2187
    %v2213 = vpack.c.b16 %v2190, %v2189
    %v2214 = vpack.c.b16 %v2192, %v2191
    %v2215 = vpack.c.b16 %v2194, %v2193
    %v2216 = vpack.c.b16 %v2196, %v2195
    %v2217 = vpack.c.b16 %v2198, %v2197
    %v2218 = vpack.c.b16 %v2200, %v2199
    %v2219 = vpack.c.b16 %v2202, %v2201
    %v2220 = vpack.c.b16 %v2204, %v2203
    %2237 = vmatpush.bf16.msra.mxu0 %v2212
    %2238 = vmatpush.bf16.msra.mxu0 %v2211
    %2239 = vmatpush.bf16.msra.mxu0 %v2210
    %2240 = vmatpush.bf16.msra.mxu0 %v2209
    %2241 = vmatpush.bf16.msra.mxu0 %v2208
    %2242 = vmatpush.bf16.msra.mxu0 %v2207
    %2243 = vmatpush.bf16.msra.mxu0 %v2206
    %2244 = vmatpush.bf16.msra.mxu0 %v2205
    %2245 = vmatmul.bf16.gmra.mxu0 %v2103
    %v2246 = vpop.f32.mrf.mxu0
    %v2247 = vadd.f32 %v2139, %v2246
    %v2248 = vpop.f32.mrf.mxu0
    %2249 = vdwg.mxu0
    %2250 = vmatpush.bf16.msra.mxu0 %v2220
    %2251 = vmatpush.bf16.msra.mxu0 %v2219
    %2252 = vmatpush.bf16.msra.mxu0 %v2218
    %2253 = vmatpush.bf16.msra.mxu0 %v2217
    %2254 = vmatpush.bf16.msra.mxu0 %v2216
    %2255 = vmatpush.bf16.msra.mxu0 %v2215
    %2256 = vmatpush.bf16.msra.mxu0 %v2214
    %2257 = vmatpush.bf16.msra.mxu0 %v2213
    %2258 = vmatmul.bf16.gmra.mxu0 %v2104
    %v2259 = vpop.f32.mrf.mxu0
    %v2260 = vadd.f32 %v2247, %v2259
    %v2261 = vpop.f32.mrf.mxu0
    %2262 = vdwg.mxu0
    %2263 = vst [vmem:[#allocation11] sm:$0xff] %v2260
    // Predicated region
    $region50: #{tpu_custom_call.1} parent=1 // pred_check
      _
    $region51: #{tpu_custom_call.1} parent=1 // pred_check_branch
      %2265 = sbr.rel (0) target = $region53
    $region52: #{tpu_custom_call.1} parent=1 // pred_region
      %2267 = vsyncadd [#allocation4], 0
      %s2269 = sshll.u32 [#allocation11], 4
      %s2270 = int_to_ptr.vmem [resolvable:$true] %s2269
      %s2271 = sshll.u32 %s7, 4
      %s2272 = int_to_ptr.hbm [resolvable:$true] %s2271
      %2274 = dma.vmem_to_hbm [thread:$0]  %s2270, 128, %s2272, [#allocation4]
    $region53: #{tpu_custom_call.1} parent=1 // pred_fallthru
      _
    // Predicated region
    $region54: #{tpu_custom_call.1} parent=1 // pred_check
      _
    $region55: #{tpu_custom_call.1} parent=1 // pred_check_branch
      %2276 = sbr.rel (0) target = $region57
    $region56: #{tpu_custom_call.1} parent=1 // pred_region
      %2278 = dma.done [#allocation4], 128
    $region57: #{tpu_custom_call.1} parent=1 // pred_fallthru
      _
    %2279 = vsyncpa [#allocation3], 1
    %2280 = vsyncpa [#allocation6], 1
    %2281 = vsyncpa [#allocation9], 1
    %2282 = vsyncpa [#allocation4], 1

</llo_original>
